<compile_context>
chip_gen: v7x
topology: tpu7x:2x2x1
jax: 0.10.0
libtpu: 0.0.40
codegen_flags: <defaults>
</compile_context>

<pallas_src>
import jax
import jax.numpy as jnp
from jax import lax
from jax.experimental import pallas as pl
from jax.experimental.pallas import tpu as pltpu


# ----------------------------- Pallas kernels ------------------------------ #
def _fused_kernel(adj_ref, x_ref, dinv_ref, w1_ref, b1_ref, w2_ref, b2_ref,
                  w3t_ref, b3_ref, out_ref):
    """Whole forward pass with the int8 A+I adjacency resident in VMEM
    (read from HBM exactly once)."""
    a = adj_ref[...].astype(jnp.bfloat16)      # exact 0/1/count values
    dinv = dinv_ref[...]                       # (npad, 1) f32, zero on padding

    # layer 1:  h1 = relu( (Ahat @ X) @ W1 + b1 ),  Ahat = dinv*(A+I)*dinv
    t1 = jnp.dot(a, x_ref[...], preferred_element_type=jnp.float32)
    h1 = jnp.maximum(
        jnp.dot(t1 * dinv, w1_ref[...], preferred_element_type=jnp.float32)
        + b1_ref[...], 0.0)

    # project to output_dim and fold the column dinv of the second sweep
    hw2 = (jnp.dot(h1, w2_ref[...], preferred_element_type=jnp.float32)
           * dinv).astype(jnp.bfloat16)

    # layer 2 + linear head, emitted as a lane-dense (1, npad) row slab
    t2 = jnp.dot(a, hw2, preferred_element_type=jnp.float32)
    h2 = jnp.maximum(t2 * dinv + b2_ref[...], 0.0)
    out_ref[...] = lax.dot_general(
        w3t_ref[...], h2, dimension_numbers=(((1,), (1,)), ((), ())),
        preferred_element_type=jnp.float32) + b3_ref[...]


def _make_layer1_kernel(tile_k):
    def kernel(adj_ref, x_ref, dinv_ref, w1_ref, b1_ref, w2_ref,
               hw2_ref, acc_ref):
        """acc += (A+I)[i, k] @ (dinv*X)[k]   (f32 accumulation over k)
           finalize: h1 = relu((dinv_i * acc) @ W1 + b1)
                     hw2 = dinv_i * (h1 @ W2)   (bf16 out)."""
        k = pl.program_id(1)

        @pl.when(k == 0)
        def _init():
            acc_ref[...] = jnp.zeros_like(acc_ref)

        off = pl.multiple_of(k * tile_k, tile_k)
        acc_ref[...] += jnp.dot(adj_ref[...].astype(jnp.bfloat16),
                                x_ref[pl.ds(off, tile_k), :],
                                preferred_element_type=jnp.float32)

        @pl.when(k == pl.num_programs(1) - 1)
        def _finalize():
            dinv = dinv_ref[...]                                  # (tile_m, 1)
            h1 = jnp.maximum(
                jnp.dot(acc_ref[...] * dinv, w1_ref[...],
                        preferred_element_type=jnp.float32) + b1_ref[...], 0.0)
            hw2_ref[...] = (jnp.dot(h1, w2_ref[...],
                                    preferred_element_type=jnp.float32)
                            * dinv).astype(hw2_ref.dtype)
    return kernel


def _make_layer2_kernel(tile_k):
    def kernel(adj_ref, hw2_ref, dinv_ref, b2_ref, w3t_ref, b3_ref,
               out_ref, acc_ref):
        """acc += (A+I)[i, k] @ hw2[k]
           finalize: h2 = relu(dinv_i * acc + b2)
                     out = (h2 @ w3 + b3)^T as a lane-dense (1, tile_m) row."""
        k = pl.program_id(1)

        @pl.when(k == 0)
        def _init():
            acc_ref[...] = jnp.zeros_like(acc_ref)

        off = pl.multiple_of(k * tile_k, tile_k)
        acc_ref[...] += jnp.dot(adj_ref[...].astype(jnp.bfloat16),
                                hw2_ref[pl.ds(off, tile_k), :],
                                preferred_element_type=jnp.float32)

        @pl.when(k == pl.num_programs(1) - 1)
        def _finalize():
            h2 = jnp.maximum(acc_ref[...] * dinv_ref[...] + b2_ref[...], 0.0)
            out_ref[...] = lax.dot_general(
                w3t_ref[...], h2, dimension_numbers=(((1,), (1,)), ((), ())),
                preferred_element_type=jnp.float32) + b3_ref[...]
    return kernel


# ------------------------------ JAX wrapper -------------------------------- #
def _round_up(x, m):
    return ((x + m - 1) // m) * m


def _choose_tile(n):
    """Pick the adjacency tile minimizing padded_bytes / measured stream
    efficiency (fractions of HBM roofline at that tile size)."""
    best = None
    for tile, eff in ((512, 0.85), (256, 0.63), (128, 0.29)):
        npad = _round_up(n, tile)
        cost = (npad * npad) / eff
        if best is None or cost < best[0]:
            best = (cost, tile, npad)
    _, tile, npad = best
    return tile, npad


def _tiled_compiler_params(tile_m, tile_k, npad, stream_feat):
    budget = (3 * tile_m * tile_k              # int8 adj tiles (multi-buffered)
              + 2 * npad * stream_feat * 2     # resident bf16 activation stream
              + 2 * tile_m * 4                 # dinv row tiles
              + tile_m * stream_feat * 4       # f32 accumulator scratch
              + 2 * tile_m * 128 * 4           # resident output block + slack
              + (6 << 20))                     # weights / biases / compiler slack
    # cap well below 64 MiB so v7x keeps headroom for internal scratch
    budget = int(min(max(budget, 16 << 20), 48 << 20))
    return pltpu.CompilerParams(
        dimension_semantics=("parallel", "arbitrary"),
        vmem_limit_bytes=budget)


def _build_graph_operands(x, edge_index, npad):
    """int8 A+I built directly at padded size, dinv column, dinv-pre-scaled
    bf16 node features.  No full-size normalized f32 matrix is formed."""
    n, feat_in = x.shape
    src = edge_index[0].astype(jnp.int32)
    dst = edge_index[1].astype(jnp.int32)

    ones_e = jnp.ones(src.shape, jnp.int32)
    in_deg = jax.ops.segment_sum(ones_e, dst, num_segments=n)
    self_cnt = jax.ops.segment_sum((src == dst).astype(jnp.int32), dst,
                                   num_segments=n)
    need_self = (self_cnt == 0)                           # add I only where absent
    deg = (in_deg + need_self.astype(jnp.int32)).astype(jnp.float32)
    dinv = jnp.where(deg > 0.0, lax.rsqrt(deg), 0.0)

    # Unnormalized A+I scattered straight into the padded int8 stream buffer;
    # padded rows / cols stay exactly zero.
    adj8 = jnp.zeros((npad, npad), jnp.int8)
    adj8 = adj8.at[dst, src].add(jnp.ones(src.shape, jnp.int8))
    nodes = jnp.arange(n, dtype=jnp.int32)
    adj8 = adj8.at[nodes, nodes].add(need_self.astype(jnp.int8))

    dinv_col = jnp.zeros((npad, 1), jnp.float32).at[:n, 0].set(dinv)
    xs = jnp.zeros((npad, feat_in), jnp.bfloat16).at[:n, :].set(
        (x * dinv[:, None]).astype(jnp.bfloat16))
    return adj8, dinv_col, xs


def gcn_ids_forward(x, edge_index, params, *, fused_max_nodes=2048):
    n, feat_in = x.shape
    w1, b1, w2, b2, w3, b3 = params
    hidden = w1.shape[1]
    feat_out = w2.shape[1]

    w1f = w1.astype(jnp.float32)
    w2f = w2.astype(jnp.float32)
    b1r = b1.reshape(1, hidden).astype(jnp.float32)
    b2r = b2.reshape(1, feat_out).astype(jnp.float32)
    w3t = w3.reshape(1, feat_out).astype(jnp.float32)     # == w3.T
    b3r = b3.reshape(1, 1).astype(jnp.float32)

    if n <= fused_max_nodes:
        # ---- fused path: adjacency resident in VMEM, N^2 read from HBM once
        npad = _round_up(n, 128)
        adj8, dinv_col, xs = _build_graph_operands(x, edge_index, npad)
        budget = int(min(max(3 * npad * npad
                             + 8 * npad * max(feat_in, hidden, feat_out)
                             + (8 << 20), 16 << 20), 48 << 20))
        out_row = pl.pallas_call(
            _fused_kernel,
            out_shape=jax.ShapeDtypeStruct((1, npad), jnp.float32),
            compiler_params=pltpu.CompilerParams(vmem_limit_bytes=budget),
        )(adj8, xs, dinv_col, w1f, b1r, w2f, b2r, w3t, b3r)
        return out_row[0, :n].reshape(n, 1)

    # ---- tiled path: two pipelined N^2 sweeps with large adjacency tiles ----
    tile, npad = _choose_tile(n)
    tile_m, tile_k = tile, tile
    if npad // tile_m == 1 and (npad // 2) % 128 == 0:
        tile_m = npad // 2      # keep >= 2 row tiles (2-TC sharding on v7x)

    adj8, dinv_col, xs = _build_graph_operands(x, edge_index, npad)
    grid = (npad // tile_m, npad // tile_k)

    # layer-1 sweep:  hw2 = dinv * ( relu((Ahat @ X) @ W1 + b1) @ W2 )
    hw2 = pl.pallas_call(
        _make_layer1_kernel(tile_k),
        out_shape=jax.ShapeDtypeStruct((npad, feat_out), jnp.bfloat16),
        grid=grid,
        in_specs=[
            pl.BlockSpec((tile_m, tile_k), lambda i, k: (i, k)),    # A+I (int8)
            pl.BlockSpec((npad, feat_in), lambda i, k: (0, 0)),     # x resident
            pl.BlockSpec((tile_m, 1), lambda i, k: (i, 0)),         # dinv rows
            pl.BlockSpec((feat_in, hidden), lambda i, k: (0, 0)),   # w1
            pl.BlockSpec((1, hidden), lambda i, k: (0, 0)),         # b1
            pl.BlockSpec((hidden, feat_out), lambda i, k: (0, 0)),  # w2
        ],
        out_specs=pl.BlockSpec((tile_m, feat_out), lambda i, k: (i, 0)),
        scratch_shapes=[pltpu.VMEM((tile_m, feat_in), jnp.float32)],
        compiler_params=_tiled_compiler_params(tile_m, tile_k, npad, feat_in),
    )(adj8, xs, dinv_col, w1f, b1r, w2f)

    # layer-2 sweep + linear head (lane-dense (1, N) output slab)
    out_row = pl.pallas_call(
        _make_layer2_kernel(tile_k),
        out_shape=jax.ShapeDtypeStruct((1, npad), jnp.float32),
        grid=grid,
        in_specs=[
            pl.BlockSpec((tile_m, tile_k), lambda i, k: (i, k)),    # A+I (int8)
            pl.BlockSpec((npad, feat_out), lambda i, k: (0, 0)),    # hw2 resident
            pl.BlockSpec((tile_m, 1), lambda i, k: (i, 0)),         # dinv rows
            pl.BlockSpec((1, feat_out), lambda i, k: (0, 0)),       # b2
            pl.BlockSpec((1, feat_out), lambda i, k: (0, 0)),       # w3^T
            pl.BlockSpec((1, 1), lambda i, k: (0, 0)),              # b3
        ],
        out_specs=pl.BlockSpec((1, tile_m), lambda i, k: (0, i)),
        scratch_shapes=[pltpu.VMEM((tile_m, feat_out), jnp.float32)],
        compiler_params=_tiled_compiler_params(tile_m, tile_k, npad, feat_out),
    )(adj8, hw2, dinv_col, b2r, w3t, b3r)

    return out_row[0, :n].reshape(n, 1)


# ------------------------------- reference --------------------------------- #
def reference_forward(x, edge_index, params):
    """Pure-JAX f32 reference of the PyTorch forward pass (test only)."""
    n = x.shape[0]
    src, dst = edge_index[0], edge_index[1]
    a = jnp.zeros((n, n), jnp.float32).at[dst, src].add(1.0)
    diag = jnp.diagonal(a)
    a = a + jnp.diag(jnp.where(diag > 0.0, 0.0, 1.0))
    deg = jnp.sum(a, axis=1)
    dinv = jnp.where(deg > 0.0, 1.0 / jnp.sqrt(deg), 0.0)
    adj = dinv[:, None] * a * dinv[None, :]
    w1, b1, w2, b2, w3, b3 = params
    h1 = jnp.maximum(adj @ (x @ w1) + b1, 0.0)
    h2 = jnp.maximum(adj @ (h1 @ w2) + b2, 0.0)
    return h2 @ w3 + b3


def init_params(key, input_dim, hidden_dim, output_dim):
    k1, k2, k3 = jax.random.split(key, 3)
    w1 = jax.random.normal(k1, (input_dim, hidden_dim), jnp.float32) * 0.1
    b1 = jnp.zeros((hidden_dim,), jnp.float32)
    w2 = jax.random.normal(k2, (hidden_dim, output_dim), jnp.float32) * 0.1
    b2 = jnp.zeros((output_dim,), jnp.float32)
    w3 = jax.random.normal(k3, (output_dim, 1), jnp.float32) * 0.1
    b3 = jnp.zeros((1,), jnp.float32)
    return (w1, b1, w2, b2, w3, b3)


if __name__ == "__main__":
    INPUT_DIM, HIDDEN_DIM, OUTPUT_DIM = 8, 32, 16
    key = jax.random.PRNGKey(0)
    kx1, ke1, kp, kx2, ke2 = jax.random.split(key, 5)
    params = init_params(kp, INPUT_DIM, HIDDEN_DIM, OUTPUT_DIM)

    # Small graph -> fused single-call path (adjacency resident in VMEM).
    N1, E1 = 256, 1024
    x1 = jax.random.normal(kx1, (N1, INPUT_DIM), jnp.float32)
    ei1 = jax.random.randint(ke1, (2, E1), 0, N1, jnp.int32)
    out1 = gcn_ids_forward(x1, ei1, params)
    jax.block_until_ready(out1)
    assert out1.shape == (N1, 1), out1.shape
    ref1 = reference_forward(x1, ei1, params)
    err1 = float(jnp.max(jnp.abs(out1 - ref1)))
    assert err1 < 2e-2, f"fused path max abs err {err1}"

    # Larger graph, force the tiled two-sweep path (exercises multi-k
    # accumulation, padding, and the VMEM-resident activation streams).
    N2, E2 = 700, 4096
    x2 = jax.random.normal(kx2, (N2, INPUT_DIM), jnp.float32)
    ei2 = jax.random.randint(ke2, (2, E2), 0, N2, jnp.int32)
    out2 = gcn_ids_forward(x2, ei2, params, fused_max_nodes=0)
    jax.block_until_ready(out2)
    assert out2.shape == (N2, 1), out2.shape
    ref2 = reference_forward(x2, ei2, params)
    err2 = float(jnp.max(jnp.abs(out2 - ref2)))
    assert err2 < 2e-2, f"tiled path max abs err {err2}"

    print("KERNEL_OK")
</pallas_src>

<mosaic_0001>
module attributes {stable_mosaic.version = 11 : i64} {
  func.func @_fused_kernel(%arg0: memref<256x256xi8, #tpu.memory_space<vmem>>, %arg1: memref<256x8xbf16, #tpu.memory_space<vmem>>, %arg2: memref<256x1xf32, #tpu.memory_space<vmem>>, %arg3: memref<8x32xf32, #tpu.memory_space<vmem>>, %arg4: memref<1x32xf32, #tpu.memory_space<vmem>>, %arg5: memref<32x16xf32, #tpu.memory_space<vmem>>, %arg6: memref<1x16xf32, #tpu.memory_space<vmem>>, %arg7: memref<1x16xf32, #tpu.memory_space<vmem>>, %arg8: memref<1x1xf32, #tpu.memory_space<vmem>>, %arg9: memref<1x256xf32, #tpu.memory_space<vmem>>) attributes {dimension_semantics = [], scalar_prefetch = 0 : i64, scratch_operands = 0 : i64, tpu.core_type = #tpu.core_type<tc>} {
    %c0 = arith.constant 0 : index
    %c0_0 = arith.constant 0 : index
    %0 = vector.load %arg0[%c0, %c0_0] : memref<256x256xi8, #tpu.memory_space<vmem>>, vector<256x256xi8>
    %1 = arith.sitofp %0 : vector<256x256xi8> to vector<256x256xbf16>
    %c0_1 = arith.constant 0 : index
    %c0_2 = arith.constant 0 : index
    %2 = vector.load %arg2[%c0_1, %c0_2] : memref<256x1xf32, #tpu.memory_space<vmem>>, vector<256x1xf32>
    %c0_3 = arith.constant 0 : index
    %c0_4 = arith.constant 0 : index
    %3 = vector.load %arg1[%c0_3, %c0_4] : memref<256x8xbf16, #tpu.memory_space<vmem>>, vector<256x8xbf16>
    %cst = arith.constant dense<0.000000e+00> : vector<256x8xf32>
    %4 = tpu.matmul %1, %3, %cst {dimension_numbers = #tpu.dot_dimension_numbers<[1], [0], [0], [1], [0, 0, 1, 1], [], []>} : vector<256x256xbf16>, vector<256x8xbf16>, vector<256x8xf32> -> vector<256x8xf32>
    %5 = vector.broadcast %2 : vector<256x1xf32> to vector<256x8xf32>
    %6 = arith.mulf %4, %5 : vector<256x8xf32>
    %c0_5 = arith.constant 0 : index
    %c0_6 = arith.constant 0 : index
    %7 = vector.load %arg3[%c0_5, %c0_6] : memref<8x32xf32, #tpu.memory_space<vmem>>, vector<8x32xf32>
    %cst_7 = arith.constant dense<0.000000e+00> : vector<256x32xf32>
    %8 = tpu.matmul %6, %7, %cst_7 {dimension_numbers = #tpu.dot_dimension_numbers<[1], [0], [0], [1], [0, 0, 1, 1], [], []>} : vector<256x8xf32>, vector<8x32xf32>, vector<256x32xf32> -> vector<256x32xf32>
    %c0_8 = arith.constant 0 : index
    %c0_9 = arith.constant 0 : index
    %9 = vector.load %arg4[%c0_8, %c0_9] : memref<1x32xf32, #tpu.memory_space<vmem>>, vector<1x32xf32>
    %10 = vector.broadcast %9 : vector<1x32xf32> to vector<256x32xf32>
    %11 = arith.addf %8, %10 : vector<256x32xf32>
    %cst_10 = arith.constant 0.000000e+00 : f32
    %12 = vector.broadcast %cst_10 : f32 to vector<256x32xf32>
    %13 = arith.maximumf %11, %12 : vector<256x32xf32>
    %c0_11 = arith.constant 0 : index
    %c0_12 = arith.constant 0 : index
    %14 = vector.load %arg5[%c0_11, %c0_12] : memref<32x16xf32, #tpu.memory_space<vmem>>, vector<32x16xf32>
    %cst_13 = arith.constant dense<0.000000e+00> : vector<256x16xf32>
    %15 = tpu.matmul %13, %14, %cst_13 {dimension_numbers = #tpu.dot_dimension_numbers<[1], [0], [0], [1], [0, 0, 1, 1], [], []>} : vector<256x32xf32>, vector<32x16xf32>, vector<256x16xf32> -> vector<256x16xf32>
    %16 = vector.broadcast %2 : vector<256x1xf32> to vector<256x16xf32>
    %17 = arith.mulf %15, %16 : vector<256x16xf32>
    %18 = arith.truncf %17 : vector<256x16xf32> to vector<256x16xbf16>
    %cst_14 = arith.constant dense<0.000000e+00> : vector<256x16xf32>
    %19 = tpu.matmul %1, %18, %cst_14 {dimension_numbers = #tpu.dot_dimension_numbers<[1], [0], [0], [1], [0, 0, 1, 1], [], []>} : vector<256x256xbf16>, vector<256x16xbf16>, vector<256x16xf32> -> vector<256x16xf32>
    %20 = vector.broadcast %2 : vector<256x1xf32> to vector<256x16xf32>
    %21 = arith.mulf %19, %20 : vector<256x16xf32>
    %c0_15 = arith.constant 0 : index
    %c0_16 = arith.constant 0 : index
    %22 = vector.load %arg6[%c0_15, %c0_16] : memref<1x16xf32, #tpu.memory_space<vmem>>, vector<1x16xf32>
    %23 = vector.broadcast %22 : vector<1x16xf32> to vector<256x16xf32>
    %24 = arith.addf %21, %23 : vector<256x16xf32>
    %cst_17 = arith.constant 0.000000e+00 : f32
    %25 = vector.broadcast %cst_17 : f32 to vector<256x16xf32>
    %26 = arith.maximumf %24, %25 : vector<256x16xf32>
    %c0_18 = arith.constant 0 : index
    %c0_19 = arith.constant 0 : index
    %27 = vector.load %arg7[%c0_18, %c0_19] : memref<1x16xf32, #tpu.memory_space<vmem>>, vector<1x16xf32>
    %cst_20 = arith.constant dense<0.000000e+00> : vector<1x256xf32>
    %28 = tpu.matmul %27, %26, %cst_20 {dimension_numbers = #tpu.dot_dimension_numbers<[1], [1], [0], [0], [0, 0, 1, 0], [], []>} : vector<1x16xf32>, vector<256x16xf32>, vector<1x256xf32> -> vector<1x256xf32>
    %c0_21 = arith.constant 0 : index
    %c0_22 = arith.constant 0 : index
    %29 = vector.load %arg8[%c0_21, %c0_22] : memref<1x1xf32, #tpu.memory_space<vmem>>, vector<1x1xf32>
    %30 = vector.broadcast %29 : vector<1x1xf32> to vector<1x256xf32>
    %31 = arith.addf %28, %30 : vector<1x256xf32>
    %c0_23 = arith.constant 0 : index
    %c0_24 = arith.constant 0 : index
    %32 = vector.load %arg9[%c0_23, %c0_24] : memref<1x256xf32, #tpu.memory_space<vmem>>, vector<1x256xf32>
    tpu.vector_store %arg9[%c0_23, %c0_24], %31 {strides = array<i32>} : memref<1x256xf32, #tpu.memory_space<vmem>>, vector<1x256xf32>,
    return
  }
}

</mosaic_0001>

<llo_original>
// kernel: tpu_custom_call.1
$region0: #{tpu_custom_call.1}
  #allocation0 [shape = 'u32[]', space=smem, size = 0x4, offset = 0x4, fixed_abs, tag = 'smem constant byte address 0x4 - core index']
  #allocation1 [shape = 'u32[144,128]{1,0:T(1,128)}', space=vmem, size = 0x12000, scoped, tag = 'internal scratch']
  #allocation2 [shape = 'f32[1,1]{1,0:T(1,128)S(1)}', space=vmem, size = 0x200, scoped, tag = 'scoped memory for tpu_custom_call.1']
  %s0 = inlined_call_operand.vmem [shape: s8[256,256], index: 0, kind: input, shape index: {}]
  %s1 = inlined_call_operand.vmem [shape: bf16[256,8], index: 1, kind: input, shape index: {}]
  %s2 = inlined_call_operand.vmem [shape: f32[256,1], index: 2, kind: input, shape index: {}]
  %s3 = inlined_call_operand.vmem [shape: f32[8,32], index: 3, kind: input, shape index: {}]
  %s4 = inlined_call_operand.vmem [shape: f32[1,32], index: 4, kind: input, shape index: {}]
  %s5 = inlined_call_operand.vmem [shape: f32[32,16], index: 5, kind: input, shape index: {}]
  %s6 = inlined_call_operand.vmem [shape: f32[1,16], index: 6, kind: input, shape index: {}]
  %s7 = inlined_call_operand.vmem [shape: f32[1,16], index: 7, kind: input, shape index: {}]
  %s8 = inlined_call_operand.<no memory space> [shape: f32[1,1], index: 8, kind: input, shape index: {}]
  %s9 = inlined_call_operand.hbm [shape: f32[1,256], index: 9, kind: output, shape index: {}]
  %s10 = sld [smem:[#allocation0]]
  $region46: #{tpu_custom_call.1} parent=0
    _
  %s12 = ssub.s32 1, %s10
  %s13 = scalar_select 0, %s12, %s10
  %v14 = vstv %s8
  %15 = vst [vmem:[#allocation2] sm:$0x1] %v14
  $region1: #{tpu_custom_call.1} parent=0
    #allocation3 [shape = 'u8[1024]{0}', space=vmem, size = 0x400, scoped, tag = 'output window, operand 0, single buffered']
    #allocation4 [shape = 's32[1]{0}', space=sflag, size = 0x4, scoped, tag = 'scoped memory for tpu_custom_call.1']
    %16 = vsyncpa [#allocation4], 0
    // Predicated region
    $region2: #{tpu_custom_call.1} parent=1 // pred_check
      _
    $region3: #{tpu_custom_call.1} parent=1 // pred_check_branch
      %18 = sbr.rel (0) target = $region5
    $region4: #{tpu_custom_call.1} parent=1 // pred_region
      _
    $region5: #{tpu_custom_call.1} parent=1 // pred_fallthru
      _
    // Predicated region
    $region6: #{tpu_custom_call.1} parent=1 // pred_check
      _
    $region7: #{tpu_custom_call.1} parent=1 // pred_check_branch
      %20 = sbr.rel (0) target = $region9
    $region8: #{tpu_custom_call.1} parent=1 // pred_region
      _
    $region9: #{tpu_custom_call.1} parent=1 // pred_fallthru
      _
    // Predicated region
    $region10: #{tpu_custom_call.1} parent=1 // pred_check
      _
    $region11: #{tpu_custom_call.1} parent=1 // pred_check_branch
      %22 = sbr.rel (0) target = $region13
    $region12: #{tpu_custom_call.1} parent=1 // pred_region
      _
    $region13: #{tpu_custom_call.1} parent=1 // pred_fallthru
      _
    // Predicated region
    $region14: #{tpu_custom_call.1} parent=1 // pred_check
      _
    $region15: #{tpu_custom_call.1} parent=1 // pred_check_branch
      %24 = sbr.rel (0) target = $region17
    $region16: #{tpu_custom_call.1} parent=1 // pred_region
      _
    $region17: #{tpu_custom_call.1} parent=1 // pred_fallthru
      _
    // Predicated region
    $region18: #{tpu_custom_call.1} parent=1 // pred_check
      _
    $region19: #{tpu_custom_call.1} parent=1 // pred_check_branch
      %26 = sbr.rel (0) target = $region21
    $region20: #{tpu_custom_call.1} parent=1 // pred_region
      _
    $region21: #{tpu_custom_call.1} parent=1 // pred_fallthru
      _
    // Predicated region
    $region22: #{tpu_custom_call.1} parent=1 // pred_check
      _
    $region23: #{tpu_custom_call.1} parent=1 // pred_check_branch
      %28 = sbr.rel (0) target = $region25
    $region24: #{tpu_custom_call.1} parent=1 // pred_region
      _
    $region25: #{tpu_custom_call.1} parent=1 // pred_fallthru
      _
    // Predicated region
    $region26: #{tpu_custom_call.1} parent=1 // pred_check
      _
    $region27: #{tpu_custom_call.1} parent=1 // pred_check_branch
      %30 = sbr.rel (0) target = $region29
    $region28: #{tpu_custom_call.1} parent=1 // pred_region
      _
    $region29: #{tpu_custom_call.1} parent=1 // pred_fallthru
      _
    // Predicated region
    $region30: #{tpu_custom_call.1} parent=1 // pred_check
      _
    $region31: #{tpu_custom_call.1} parent=1 // pred_check_branch
      %32 = sbr.rel (0) target = $region33
    $region32: #{tpu_custom_call.1} parent=1 // pred_region
      _
    $region33: #{tpu_custom_call.1} parent=1 // pred_fallthru
      _
    // Predicated region
    $region34: #{tpu_custom_call.1} parent=1 // pred_check
      _
    $region35: #{tpu_custom_call.1} parent=1 // pred_check_branch
      %34 = sbr.rel (0) target = $region37
    $region36: #{tpu_custom_call.1} parent=1 // pred_region
      _
    $region37: #{tpu_custom_call.1} parent=1 // pred_fallthru
      _
    %v36 = vld [vmem:[%s0] sm:$0xff]
    %v37 = vld [vmem:[%s0 + $0x8] sm:$0xff]
    %v38 = vld [vmem:[%s0 + $0x10] sm:$0xff]
    %v39 = vld [vmem:[%s0 + $0x18] sm:$0xff]
    %v40 = vld [vmem:[%s0 + $0x20] sm:$0xff]
    %v41 = vld [vmem:[%s0 + $0x28] sm:$0xff]
    %v42 = vld [vmem:[%s0 + $0x30] sm:$0xff]
    %v43 = vld [vmem:[%s0 + $0x38] sm:$0xff]
    %v44 = vld [vmem:[%s0 + $0x40] sm:$0xff]
    %v45 = vld [vmem:[%s0 + $0x48] sm:$0xff]
    %v46 = vld [vmem:[%s0 + $0x50] sm:$0xff]
    %v47 = vld [vmem:[%s0 + $0x58] sm:$0xff]
    %v48 = vld [vmem:[%s0 + $0x60] sm:$0xff]
    %v49 = vld [vmem:[%s0 + $0x68] sm:$0xff]
    %v50 = vld [vmem:[%s0 + $0x70] sm:$0xff]
    %v51 = vld [vmem:[%s0 + $0x78] sm:$0xff]
    %v52 = vunpack.c.l.s8.bf16 %v36
    %v53 = vunpack.c.l.s8.bf16 %v37
    %v54 = vunpack.c.h.s8.bf16 %v36
    %v55 = vunpack.c.h.s8.bf16 %v37
    %v56 = vunpack.c.l.s8.bf16 %v38
    %v57 = vunpack.c.l.s8.bf16 %v39
    %v58 = vunpack.c.h.s8.bf16 %v38
    %v59 = vunpack.c.h.s8.bf16 %v39
    %v60 = vunpack.c.l.s8.bf16 %v40
    %v61 = vunpack.c.l.s8.bf16 %v41
    %v62 = vunpack.c.h.s8.bf16 %v40
    %v63 = vunpack.c.h.s8.bf16 %v41
    %v64 = vunpack.c.l.s8.bf16 %v42
    %v65 = vunpack.c.l.s8.bf16 %v43
    %v66 = vunpack.c.h.s8.bf16 %v42
    %v67 = vunpack.c.h.s8.bf16 %v43
    %v68 = vunpack.c.l.s8.bf16 %v44
    %v69 = vunpack.c.l.s8.bf16 %v45
    %v70 = vunpack.c.h.s8.bf16 %v44
    %v71 = vunpack.c.h.s8.bf16 %v45
    %v72 = vunpack.c.l.s8.bf16 %v46
    %v73 = vunpack.c.l.s8.bf16 %v47
    %v74 = vunpack.c.h.s8.bf16 %v46
    %v75 = vunpack.c.h.s8.bf16 %v47
    %v76 = vunpack.c.l.s8.bf16 %v48
    %v77 = vunpack.c.l.s8.bf16 %v49
    %v78 = vunpack.c.h.s8.bf16 %v48
    %v79 = vunpack.c.h.s8.bf16 %v49
    %v80 = vunpack.c.l.s8.bf16 %v50
    %v81 = vunpack.c.l.s8.bf16 %v51
    %v82 = vunpack.c.h.s8.bf16 %v50
    %v83 = vunpack.c.h.s8.bf16 %v51
    %v84 = vld [vmem:[%s2] sm:$0xff]
    %v85 = vld [vmem:[%s2 + $0x8] sm:$0xff]
    %v86 = vld [vmem:[%s2 + $0x10] sm:$0xff]
    %v87 = vld [vmem:[%s2 + $0x18] sm:$0xff]
    %v88 = vld [vmem:[%s2 + $0x20] sm:$0xff]
    %v89 = vld [vmem:[%s2 + $0x28] sm:$0xff]
    %v90 = vld [vmem:[%s2 + $0x30] sm:$0xff]
    %v91 = vld [vmem:[%s2 + $0x38] sm:$0xff]
    %v92 = vld [vmem:[%s2 + $0x40] sm:$0xff]
    %v93 = vld [vmem:[%s2 + $0x48] sm:$0xff]
    %v94 = vld [vmem:[%s2 + $0x50] sm:$0xff]
    %v95 = vld [vmem:[%s2 + $0x58] sm:$0xff]
    %v96 = vld [vmem:[%s2 + $0x60] sm:$0xff]
    %v97 = vld [vmem:[%s2 + $0x68] sm:$0xff]
    %v98 = vld [vmem:[%s2 + $0x70] sm:$0xff]
    %v99 = vld [vmem:[%s2 + $0x78] sm:$0xff]
    %v100 = vld [vmem:[%s2 + $0x80] sm:$0xff]
    %v101 = vld [vmem:[%s2 + $0x88] sm:$0xff]
    %v102 = vld [vmem:[%s2 + $0x90] sm:$0xff]
    %v103 = vld [vmem:[%s2 + $0x98] sm:$0xff]
    %v104 = vld [vmem:[%s2 + $0xa0] sm:$0xff]
    %v105 = vld [vmem:[%s2 + $0xa8] sm:$0xff]
    %v106 = vld [vmem:[%s2 + $0xb0] sm:$0xff]
    %v107 = vld [vmem:[%s2 + $0xb8] sm:$0xff]
    %v108 = vld [vmem:[%s2 + $0xc0] sm:$0xff]
    %v109 = vld [vmem:[%s2 + $0xc8] sm:$0xff]
    %v110 = vld [vmem:[%s2 + $0xd0] sm:$0xff]
    %v111 = vld [vmem:[%s2 + $0xd8] sm:$0xff]
    %v112 = vld [vmem:[%s2 + $0xe0] sm:$0xff]
    %v113 = vld [vmem:[%s2 + $0xe8] sm:$0xff]
    %v114 = vld [vmem:[%s2 + $0xf0] sm:$0xff]
    %v115 = vld [vmem:[%s2 + $0xf8] sm:$0xff]
    %v116 = vld [vmem:[%s1] sm:$0xf]
    %v117 = vld [vmem:[%s1 + $0x4] sm:$0xf]
    %v118 = vld [vmem:[%s1 + $0x8] sm:$0xf]
    %v119 = vld [vmem:[%s1 + $0xc] sm:$0xf]
    %v120 = vld [vmem:[%s1 + $0x10] sm:$0xf]
    %v121 = vld [vmem:[%s1 + $0x14] sm:$0xf]
    %v122 = vld [vmem:[%s1 + $0x18] sm:$0xf]
    %v123 = vld [vmem:[%s1 + $0x1c] sm:$0xf]
    %v124 = vld [vmem:[%s1 + $0x20] sm:$0xf]
    %v125 = vld [vmem:[%s1 + $0x24] sm:$0xf]
    %v126 = vld [vmem:[%s1 + $0x28] sm:$0xf]
    %v127 = vld [vmem:[%s1 + $0x2c] sm:$0xf]
    %v128 = vld [vmem:[%s1 + $0x30] sm:$0xf]
    %v129 = vld [vmem:[%s1 + $0x34] sm:$0xf]
    %v130 = vld [vmem:[%s1 + $0x38] sm:$0xf]
    %v131 = vld [vmem:[%s1 + $0x3c] sm:$0xf]
    %v132 = vld [vmem:[%s1 + $0x40] sm:$0xf]
    %v133 = vld [vmem:[%s1 + $0x44] sm:$0xf]
    %v134 = vld [vmem:[%s1 + $0x48] sm:$0xf]
    %v135 = vld [vmem:[%s1 + $0x4c] sm:$0xf]
    %v136 = vld [vmem:[%s1 + $0x50] sm:$0xf]
    %v137 = vld [vmem:[%s1 + $0x54] sm:$0xf]
    %v138 = vld [vmem:[%s1 + $0x58] sm:$0xf]
    %v139 = vld [vmem:[%s1 + $0x5c] sm:$0xf]
    %v140 = vld [vmem:[%s1 + $0x60] sm:$0xf]
    %v141 = vld [vmem:[%s1 + $0x64] sm:$0xf]
    %v142 = vld [vmem:[%s1 + $0x68] sm:$0xf]
    %v143 = vld [vmem:[%s1 + $0x6c] sm:$0xf]
    %v144 = vld [vmem:[%s1 + $0x70] sm:$0xf]
    %v145 = vld [vmem:[%s1 + $0x74] sm:$0xf]
    %v146 = vld [vmem:[%s1 + $0x78] sm:$0xf]
    %v147 = vld [vmem:[%s1 + $0x7c] sm:$0xf]
    %v180 = vunpack.c.l.b16 %v116
    %v181 = vunpack.c.l.b16 %v117
    %v182 = vunpack.c.l.b16 %v118
    %v183 = vunpack.c.l.b16 %v119
    %v184 = vunpack.c.l.b16 %v120
    %v185 = vunpack.c.l.b16 %v121
    %v186 = vunpack.c.l.b16 %v122
    %v187 = vunpack.c.l.b16 %v123
    %v188 = vunpack.c.l.b16 %v124
    %v189 = vunpack.c.l.b16 %v125
    %v190 = vunpack.c.l.b16 %v126
    %v191 = vunpack.c.l.b16 %v127
    %v192 = vunpack.c.l.b16 %v128
    %v193 = vunpack.c.l.b16 %v129
    %v194 = vunpack.c.l.b16 %v130
    %v195 = vunpack.c.l.b16 %v131
    %v196 = vunpack.c.l.b16 %v132
    %v197 = vunpack.c.l.b16 %v133
    %v198 = vunpack.c.l.b16 %v134
    %v199 = vunpack.c.l.b16 %v135
    %v200 = vunpack.c.l.b16 %v136
    %v201 = vunpack.c.l.b16 %v137
    %v202 = vunpack.c.l.b16 %v138
    %v203 = vunpack.c.l.b16 %v139
    %v204 = vunpack.c.l.b16 %v140
    %v205 = vunpack.c.l.b16 %v141
    %v206 = vunpack.c.l.b16 %v142
    %v207 = vunpack.c.l.b16 %v143
    %v208 = vunpack.c.l.b16 %v144
    %v209 = vunpack.c.l.b16 %v145
    %v210 = vunpack.c.l.b16 %v146
    %v211 = vunpack.c.l.b16 %v147
    %v212 = vpack.c.b16 %v181, %v180
    %v213 = vpack.c.b16 %v183, %v182
    %v214 = vpack.c.b16 %v185, %v184
    %v215 = vpack.c.b16 %v187, %v186
    %v216 = vpack.c.b16 %v189, %v188
    %v217 = vpack.c.b16 %v191, %v190
    %v218 = vpack.c.b16 %v193, %v192
    %v219 = vpack.c.b16 %v195, %v194
    %v220 = vpack.c.b16 %v197, %v196
    %v221 = vpack.c.b16 %v199, %v198
    %v222 = vpack.c.b16 %v201, %v200
    %v223 = vpack.c.b16 %v203, %v202
    %v224 = vpack.c.b16 %v205, %v204
    %v225 = vpack.c.b16 %v207, %v206
    %v226 = vpack.c.b16 %v209, %v208
    %v227 = vpack.c.b16 %v211, %v210
    %244 = vmatprep.subr.bf16.mxu0 0
    %245 = vmatpush1.bf16.msra.mxu0 %v212
    %246 = vmatprep.subr.bf16.mxu0 0
    %247 = vmatpush1.bf16.msra.mxu0 %v213
    %248 = vmatprep.subr.bf16.mxu0 0
    %249 = vmatpush1.bf16.msra.mxu0 %v214
    %250 = vmatprep.subr.bf16.mxu0 0
    %251 = vmatpush1.bf16.msra.mxu0 %v215
    %252 = vmatprep.subr.bf16.mxu0 0
    %253 = vmatpush1.bf16.msra.mxu0 %v216
    %254 = vmatprep.subr.bf16.mxu0 0
    %255 = vmatpush1.bf16.msra.mxu0 %v217
    %256 = vmatprep.subr.bf16.mxu0 0
    %257 = vmatpush1.bf16.msra.mxu0 %v218
    %258 = vmatprep.subr.bf16.mxu0 0
    %259 = vmatpush1.bf16.msra.mxu0 %v219
    %260 = vmatprep.subr.bf16.mxu0 0
    %261 = vmatpush1.bf16.msra.mxu0 %v220
    %262 = vmatprep.subr.bf16.mxu0 0
    %263 = vmatpush1.bf16.msra.mxu0 %v221
    %264 = vmatprep.subr.bf16.mxu0 0
    %265 = vmatpush1.bf16.msra.mxu0 %v222
    %266 = vmatprep.subr.bf16.mxu0 0
    %267 = vmatpush1.bf16.msra.mxu0 %v223
    %268 = vmatprep.subr.bf16.mxu0 0
    %269 = vmatpush1.bf16.msra.mxu0 %v224
    %270 = vmatprep.subr.bf16.mxu0 0
    %271 = vmatpush1.bf16.msra.mxu0 %v225
    %272 = vmatprep.subr.bf16.mxu0 0
    %273 = vmatpush1.bf16.msra.mxu0 %v226
    %274 = vmatprep.subr.bf16.mxu0 0
    %275 = vmatpush1.bf16.msra.mxu0 %v227
    %276 = vmatprep.mubr.bf16.mxu0 %v53
    %277 = vmatmul.mubr.bf16.gmra.mrb[0].mxu0 %v52
    %v278 = vpop.f32.mrb[0].mxu0
    %v279 = vadd.f32 0.0, %v278
    %v280 = vpop.f32.mrb[0].mxu0
    %v281 = vpop.f32.mrb[0].mxu0
    %v282 = vadd.f32 0.0, %v281
    %v283 = vpop.f32.mrb[0].mxu0
    %284 = vmatprep.mubr.bf16.mxu0 %v55
    %285 = vmatmul.mubr.bf16.gmra.mrb[0].mxu0 %v54
    %v286 = vpop.f32.mrb[0].mxu0
    %v287 = vadd.f32 0.0, %v286
    %v288 = vpop.f32.mrb[0].mxu0
    %v289 = vpop.f32.mrb[0].mxu0
    %v290 = vadd.f32 0.0, %v289
    %v291 = vpop.f32.mrb[0].mxu0
    %292 = vmatprep.mubr.bf16.mxu0 %v57
    %293 = vmatmul.mubr.bf16.gmra.mrb[0].mxu0 %v56
    %v294 = vpop.f32.mrb[0].mxu0
    %v295 = vadd.f32 0.0, %v294
    %v296 = vpop.f32.mrb[0].mxu0
    %v297 = vpop.f32.mrb[0].mxu0
    %v298 = vadd.f32 0.0, %v297
    %v299 = vpop.f32.mrb[0].mxu0
    %300 = vmatprep.mubr.bf16.mxu0 %v59
    %301 = vmatmul.mubr.bf16.gmra.mrb[0].mxu0 %v58
    %v302 = vpop.f32.mrb[0].mxu0
    %v303 = vadd.f32 0.0, %v302
    %v304 = vpop.f32.mrb[0].mxu0
    %v305 = vpop.f32.mrb[0].mxu0
    %v306 = vadd.f32 0.0, %v305
    %v307 = vpop.f32.mrb[0].mxu0
    %308 = vmatprep.mubr.bf16.mxu0 %v61
    %309 = vmatmul.mubr.bf16.gmra.mrb[0].mxu0 %v60
    %v310 = vpop.f32.mrb[0].mxu0
    %v311 = vadd.f32 0.0, %v310
    %v312 = vpop.f32.mrb[0].mxu0
    %v313 = vpop.f32.mrb[0].mxu0
    %v314 = vadd.f32 0.0, %v313
    %v315 = vpop.f32.mrb[0].mxu0
    %316 = vmatprep.mubr.bf16.mxu0 %v63
    %317 = vmatmul.mubr.bf16.gmra.mrb[0].mxu0 %v62
    %v318 = vpop.f32.mrb[0].mxu0
    %v319 = vadd.f32 0.0, %v318
    %v320 = vpop.f32.mrb[0].mxu0
    %v321 = vpop.f32.mrb[0].mxu0
    %v322 = vadd.f32 0.0, %v321
    %v323 = vpop.f32.mrb[0].mxu0
    %324 = vmatprep.mubr.bf16.mxu0 %v65
    %325 = vmatmul.mubr.bf16.gmra.mrb[0].mxu0 %v64
    %v326 = vpop.f32.mrb[0].mxu0
    %v327 = vadd.f32 0.0, %v326
    %v328 = vpop.f32.mrb[0].mxu0
    %v329 = vpop.f32.mrb[0].mxu0
    %v330 = vadd.f32 0.0, %v329
    %v331 = vpop.f32.mrb[0].mxu0
    %332 = vmatprep.mubr.bf16.mxu0 %v67
    %333 = vmatmul.mubr.bf16.gmra.mrb[0].mxu0 %v66
    %v334 = vpop.f32.mrb[0].mxu0
    %v335 = vadd.f32 0.0, %v334
    %v336 = vpop.f32.mrb[0].mxu0
    %v337 = vpop.f32.mrb[0].mxu0
    %v338 = vadd.f32 0.0, %v337
    %v339 = vpop.f32.mrb[0].mxu0
    %340 = vmatprep.mubr.bf16.mxu0 %v69
    %341 = vmatmul.mubr.bf16.gmra.mrb[0].mxu0 %v68
    %v342 = vpop.f32.mrb[0].mxu0
    %v343 = vadd.f32 0.0, %v342
    %v344 = vpop.f32.mrb[0].mxu0
    %v345 = vpop.f32.mrb[0].mxu0
    %v346 = vadd.f32 0.0, %v345
    %v347 = vpop.f32.mrb[0].mxu0
    %348 = vmatprep.mubr.bf16.mxu0 %v71
    %349 = vmatmul.mubr.bf16.gmra.mrb[0].mxu0 %v70
    %v350 = vpop.f32.mrb[0].mxu0
    %v351 = vadd.f32 0.0, %v350
    %v352 = vpop.f32.mrb[0].mxu0
    %v353 = vpop.f32.mrb[0].mxu0
    %v354 = vadd.f32 0.0, %v353
    %v355 = vpop.f32.mrb[0].mxu0
    %356 = vmatprep.mubr.bf16.mxu0 %v73
    %357 = vmatmul.mubr.bf16.gmra.mrb[0].mxu0 %v72
    %v358 = vpop.f32.mrb[0].mxu0
    %v359 = vadd.f32 0.0, %v358
    %v360 = vpop.f32.mrb[0].mxu0
    %v361 = vpop.f32.mrb[0].mxu0
    %v362 = vadd.f32 0.0, %v361
    %v363 = vpop.f32.mrb[0].mxu0
    %364 = vmatprep.mubr.bf16.mxu0 %v75
    %365 = vmatmul.mubr.bf16.gmra.mrb[0].mxu0 %v74
    %v366 = vpop.f32.mrb[0].mxu0
    %v367 = vadd.f32 0.0, %v366
    %v368 = vpop.f32.mrb[0].mxu0
    %v369 = vpop.f32.mrb[0].mxu0
    %v370 = vadd.f32 0.0, %v369
    %v371 = vpop.f32.mrb[0].mxu0
    %372 = vmatprep.mubr.bf16.mxu0 %v77
    %373 = vmatmul.mubr.bf16.gmra.mrb[0].mxu0 %v76
    %v374 = vpop.f32.mrb[0].mxu0
    %v375 = vadd.f32 0.0, %v374
    %v376 = vpop.f32.mrb[0].mxu0
    %v377 = vpop.f32.mrb[0].mxu0
    %v378 = vadd.f32 0.0, %v377
    %v379 = vpop.f32.mrb[0].mxu0
    %380 = vmatprep.mubr.bf16.mxu0 %v79
    %381 = vmatmul.mubr.bf16.gmra.mrb[0].mxu0 %v78
    %v382 = vpop.f32.mrb[0].mxu0
    %v383 = vadd.f32 0.0, %v382
    %v384 = vpop.f32.mrb[0].mxu0
    %v385 = vpop.f32.mrb[0].mxu0
    %v386 = vadd.f32 0.0, %v385
    %v387 = vpop.f32.mrb[0].mxu0
    %388 = vmatprep.mubr.bf16.mxu0 %v81
    %389 = vmatmul.mubr.bf16.gmra.mrb[0].mxu0 %v80
    %v390 = vpop.f32.mrb[0].mxu0
    %v391 = vadd.f32 0.0, %v390
    %v392 = vpop.f32.mrb[0].mxu0
    %v393 = vpop.f32.mrb[0].mxu0
    %v394 = vadd.f32 0.0, %v393
    %v395 = vpop.f32.mrb[0].mxu0
    %396 = vmatprep.mubr.bf16.mxu0 %v83
    %397 = vmatmul.mubr.bf16.gmra.mrb[0].mxu0 %v82
    %v398 = vpop.f32.mrb[0].mxu0
    %v399 = vadd.f32 0.0, %v398
    %v400 = vpop.f32.mrb[0].mxu0
    %v401 = vpop.f32.mrb[0].mxu0
    %v402 = vadd.f32 0.0, %v401
    %v403 = vpop.f32.mrb[0].mxu0
    %404 = vdwg.mxu0
    %406 = vset.pattern.permute.xlu0 0
    %407 = vperm.xlu0 %406, %v84
    %v408 = vpop.permute.xlu0 %407
    %411 = vset.pattern.permute.xlu0 0
    %412 = vperm.xlu0 %411, %v85
    %v413 = vpop.permute.xlu0 %412
    %416 = vset.pattern.permute.xlu0 0
    %417 = vperm.xlu0 %416, %v86
    %v418 = vpop.permute.xlu0 %417
    %421 = vset.pattern.permute.xlu0 0
    %422 = vperm.xlu0 %421, %v87
    %v423 = vpop.permute.xlu0 %422
    %426 = vset.pattern.permute.xlu0 0
    %427 = vperm.xlu0 %426, %v88
    %v428 = vpop.permute.xlu0 %427
    %431 = vset.pattern.permute.xlu0 0
    %432 = vperm.xlu0 %431, %v89
    %v433 = vpop.permute.xlu0 %432
    %436 = vset.pattern.permute.xlu0 0
    %437 = vperm.xlu0 %436, %v90
    %v438 = vpop.permute.xlu0 %437
    %441 = vset.pattern.permute.xlu0 0
    %442 = vperm.xlu0 %441, %v91
    %v443 = vpop.permute.xlu0 %442
    %446 = vset.pattern.permute.xlu0 0
    %447 = vperm.xlu0 %446, %v92
    %v448 = vpop.permute.xlu0 %447
    %451 = vset.pattern.permute.xlu0 0
    %452 = vperm.xlu0 %451, %v93
    %v453 = vpop.permute.xlu0 %452
    %456 = vset.pattern.permute.xlu0 0
    %457 = vperm.xlu0 %456, %v94
    %v458 = vpop.permute.xlu0 %457
    %461 = vset.pattern.permute.xlu0 0
    %462 = vperm.xlu0 %461, %v95
    %v463 = vpop.permute.xlu0 %462
    %466 = vset.pattern.permute.xlu0 0
    %467 = vperm.xlu0 %466, %v96
    %v468 = vpop.permute.xlu0 %467
    %471 = vset.pattern.permute.xlu0 0
    %472 = vperm.xlu0 %471, %v97
    %v473 = vpop.permute.xlu0 %472
    %476 = vset.pattern.permute.xlu0 0
    %477 = vperm.xlu0 %476, %v98
    %v478 = vpop.permute.xlu0 %477
    %481 = vset.pattern.permute.xlu0 0
    %482 = vperm.xlu0 %481, %v99
    %v483 = vpop.permute.xlu0 %482
    %486 = vset.pattern.permute.xlu0 0
    %487 = vperm.xlu0 %486, %v100
    %v488 = vpop.permute.xlu0 %487
    %491 = vset.pattern.permute.xlu0 0
    %492 = vperm.xlu0 %491, %v101
    %v493 = vpop.permute.xlu0 %492
    %496 = vset.pattern.permute.xlu0 0
    %497 = vperm.xlu0 %496, %v102
    %v498 = vpop.permute.xlu0 %497
    %501 = vset.pattern.permute.xlu0 0
    %502 = vperm.xlu0 %501, %v103
    %v503 = vpop.permute.xlu0 %502
    %506 = vset.pattern.permute.xlu0 0
    %507 = vperm.xlu0 %506, %v104
    %v508 = vpop.permute.xlu0 %507
    %511 = vset.pattern.permute.xlu0 0
    %512 = vperm.xlu0 %511, %v105
    %v513 = vpop.permute.xlu0 %512
    %516 = vset.pattern.permute.xlu0 0
    %517 = vperm.xlu0 %516, %v106
    %v518 = vpop.permute.xlu0 %517
    %521 = vset.pattern.permute.xlu0 0
    %522 = vperm.xlu0 %521, %v107
    %v523 = vpop.permute.xlu0 %522
    %526 = vset.pattern.permute.xlu0 0
    %527 = vperm.xlu0 %526, %v108
    %v528 = vpop.permute.xlu0 %527
    %531 = vset.pattern.permute.xlu0 0
    %532 = vperm.xlu0 %531, %v109
    %v533 = vpop.permute.xlu0 %532
    %536 = vset.pattern.permute.xlu0 0
    %537 = vperm.xlu0 %536, %v110
    %v538 = vpop.permute.xlu0 %537
    %541 = vset.pattern.permute.xlu0 0
    %542 = vperm.xlu0 %541, %v111
    %v543 = vpop.permute.xlu0 %542
    %546 = vset.pattern.permute.xlu0 0
    %547 = vperm.xlu0 %546, %v112
    %v548 = vpop.permute.xlu0 %547
    %551 = vset.pattern.permute.xlu0 0
    %552 = vperm.xlu0 %551, %v113
    %v553 = vpop.permute.xlu0 %552
    %556 = vset.pattern.permute.xlu0 0
    %557 = vperm.xlu0 %556, %v114
    %v558 = vpop.permute.xlu0 %557
    %561 = vset.pattern.permute.xlu0 0
    %562 = vperm.xlu0 %561, %v115
    %v563 = vpop.permute.xlu0 %562
    %v565 = vmul.f32 %v279, %v408
    %v566 = vmul.f32 %v282, %v413
    %v567 = vmul.f32 %v287, %v418
    %v568 = vmul.f32 %v290, %v423
    %v569 = vmul.f32 %v295, %v428
    %v570 = vmul.f32 %v298, %v433
    %v571 = vmul.f32 %v303, %v438
    %v572 = vmul.f32 %v306, %v443
    %v573 = vmul.f32 %v311, %v448
    %v574 = vmul.f32 %v314, %v453
    %v575 = vmul.f32 %v319, %v458
    %v576 = vmul.f32 %v322, %v463
    %v577 = vmul.f32 %v327, %v468
    %v578 = vmul.f32 %v330, %v473
    %v579 = vmul.f32 %v335, %v478
    %v580 = vmul.f32 %v338, %v483
    %v581 = vmul.f32 %v343, %v488
    %v582 = vmul.f32 %v346, %v493
    %v583 = vmul.f32 %v351, %v498
    %v584 = vmul.f32 %v354, %v503
    %v585 = vmul.f32 %v359, %v508
    %v586 = vmul.f32 %v362, %v513
    %v587 = vmul.f32 %v367, %v518
    %v588 = vmul.f32 %v370, %v523
    %v589 = vmul.f32 %v375, %v528
    %v590 = vmul.f32 %v378, %v533
    %v591 = vmul.f32 %v383, %v538
    %v592 = vmul.f32 %v386, %v543
    %v593 = vmul.f32 %v391, %v548
    %v594 = vmul.f32 %v394, %v553
    %v595 = vmul.f32 %v399, %v558
    %v596 = vmul.f32 %v402, %v563
    %v597 = vld [vmem:[%s3] sm:$0xff]
    %v598 = vld [vmem:[%s4] sm:$0x1]
    %v600 = vlaneseq
    %v601 = vshrl.u32 %v600, 7
    %v602 = vsub.s32 0, %v601
    %v603 = vrot.slane %v598, %v602
    %vm605 = vcmask 64512
    %v607 = vsel %vm605, %v565, 0
    %v610 = vsel %vm605, %v566, 0
    %v613 = vsel %vm605, %v567, 0
    %v616 = vsel %vm605, %v568, 0
    %v619 = vsel %vm605, %v569, 0
    %v622 = vsel %vm605, %v570, 0
    %v625 = vsel %vm605, %v571, 0
    %v628 = vsel %vm605, %v572, 0
    %v631 = vsel %vm605, %v573, 0
    %v634 = vsel %vm605, %v574, 0
    %v637 = vsel %vm605, %v575, 0
    %v640 = vsel %vm605, %v576, 0
    %v643 = vsel %vm605, %v577, 0
    %v646 = vsel %vm605, %v578, 0
    %v649 = vsel %vm605, %v579, 0
    %v652 = vsel %vm605, %v580, 0
    %v655 = vsel %vm605, %v581, 0
    %v658 = vsel %vm605, %v582, 0
    %v661 = vsel %vm605, %v583, 0
    %v664 = vsel %vm605, %v584, 0
    %v667 = vsel %vm605, %v585, 0
    %v670 = vsel %vm605, %v586, 0
    %v673 = vsel %vm605, %v587, 0
    %v676 = vsel %vm605, %v588, 0
    %v679 = vsel %vm605, %v589, 0
    %v682 = vsel %vm605, %v590, 0
    %v685 = vsel %vm605, %v591, 0
    %v688 = vsel %vm605, %v592, 0
    %v691 = vsel %vm605, %v593, 0
    %v694 = vsel %vm605, %v594, 0
    %v697 = vsel %vm605, %v595, 0
    %v700 = vsel %vm605, %v596, 0
    %702 = vmatprep.subr.mxu0 0.0
    %703 = vmatpush1.msra.mxu0 %v597
    %704 = vmatprep.subr.mxu0 0.0
    %705 = vmatpush1.msra.mxu0 0.0
    %706 = vmatprep.subr.mxu0 0.0
    %707 = vmatpush1.msra.mxu0 0.0
    %708 = vmatprep.subr.mxu0 0.0
    %709 = vmatpush1.msra.mxu0 0.0
    %710 = vmatprep.subr.mxu0 0.0
    %711 = vmatpush1.msra.mxu0 0.0
    %712 = vmatprep.subr.mxu0 0.0
    %713 = vmatpush1.msra.mxu0 0.0
    %714 = vmatprep.subr.mxu0 0.0
    %715 = vmatpush1.msra.mxu0 0.0
    %716 = vmatprep.subr.mxu0 0.0
    %717 = vmatpush1.msra.mxu0 0.0
    %718 = vmatprep.subr.mxu0 0.0
    %719 = vmatpush1.msra.mxu0 0.0
    %720 = vmatprep.subr.mxu0 0.0
    %721 = vmatpush1.msra.mxu0 0.0
    %722 = vmatprep.subr.mxu0 0.0
    %723 = vmatpush1.msra.mxu0 0.0
    %724 = vmatprep.subr.mxu0 0.0
    %725 = vmatpush1.msra.mxu0 0.0
    %726 = vmatprep.subr.mxu0 0.0
    %727 = vmatpush1.msra.mxu0 0.0
    %728 = vmatprep.subr.mxu0 0.0
    %729 = vmatpush1.msra.mxu0 0.0
    %730 = vmatprep.subr.mxu0 0.0
    %731 = vmatpush1.msra.mxu0 0.0
    %732 = vmatprep.subr.mxu0 0.0
    %733 = vmatpush1.msra.mxu0 0.0
    %734 = vmatprep.subr.mxu0 0.0
    %735 = vmatpush1.msra.mxu0 0.0
    %736 = vmatprep.subr.mxu0 0.0
    %737 = vmatpush1.msra.mxu0 0.0
    %738 = vmatprep.subr.mxu0 0.0
    %739 = vmatpush1.msra.mxu0 0.0
    %740 = vmatprep.subr.mxu0 0.0
    %741 = vmatpush1.msra.mxu0 0.0
    %742 = vmatprep.subr.mxu0 0.0
    %743 = vmatpush1.msra.mxu0 0.0
    %744 = vmatprep.subr.mxu0 0.0
    %745 = vmatpush1.msra.mxu0 0.0
    %746 = vmatprep.subr.mxu0 0.0
    %747 = vmatpush1.msra.mxu0 0.0
    %748 = vmatprep.subr.mxu0 0.0
    %749 = vmatpush1.msra.mxu0 0.0
    %750 = vmatprep.subr.mxu0 0.0
    %751 = vmatpush1.msra.mxu0 0.0
    %752 = vmatprep.subr.mxu0 0.0
    %753 = vmatpush1.msra.mxu0 0.0
    %754 = vmatprep.subr.mxu0 0.0
    %755 = vmatpush1.msra.mxu0 0.0
    %756 = vmatprep.subr.mxu0 0.0
    %757 = vmatpush1.msra.mxu0 0.0
    %758 = vmatprep.subr.mxu0 0.0
    %759 = vmatpush1.msra.mxu0 0.0
    %760 = vmatprep.subr.mxu0 0.0
    %761 = vmatpush1.msra.mxu0 0.0
    %762 = vmatprep.subr.mxu0 0.0
    %763 = vmatpush1.msra.mxu0 0.0
    %764 = vmatprep.subr.mxu0 0.0
    %765 = vmatpush1.msra.mxu0 0.0
    %766 = vmatprep.mubr.f32.mxu0 0.0
    %767 = vmatmul.mubr.f32.gmra.mrb[0].mxu0 %v607
    %v768 = vpop.f32.mrb[0].mxu0
    %v769 = vadd.f32 %v603, %v768
    %v770 = vpop.f32.mrb[0].mxu0
    %771 = vmatprep.mubr.f32.mxu0 0.0
    %772 = vmatmul.mubr.f32.gmra.mrb[0].mxu0 %v610
    %v773 = vpop.f32.mrb[0].mxu0
    %v774 = vadd.f32 %v603, %v773
    %v775 = vpop.f32.mrb[0].mxu0
    %776 = vmatprep.mubr.f32.mxu0 0.0
    %777 = vmatmul.mubr.f32.gmra.mrb[0].mxu0 %v613
    %v778 = vpop.f32.mrb[0].mxu0
    %v779 = vadd.f32 %v603, %v778
    %v780 = vpop.f32.mrb[0].mxu0
    %781 = vmatprep.mubr.f32.mxu0 0.0
    %782 = vmatmul.mubr.f32.gmra.mrb[0].mxu0 %v616
    %v783 = vpop.f32.mrb[0].mxu0
    %v784 = vadd.f32 %v603, %v783
    %v785 = vpop.f32.mrb[0].mxu0
    %786 = vmatprep.mubr.f32.mxu0 0.0
    %787 = vmatmul.mubr.f32.gmra.mrb[0].mxu0 %v619
    %v788 = vpop.f32.mrb[0].mxu0
    %v789 = vadd.f32 %v603, %v788
    %v790 = vpop.f32.mrb[0].mxu0
    %791 = vmatprep.mubr.f32.mxu0 0.0
    %792 = vmatmul.mubr.f32.gmra.mrb[0].mxu0 %v622
    %v793 = vpop.f32.mrb[0].mxu0
    %v794 = vadd.f32 %v603, %v793
    %v795 = vpop.f32.mrb[0].mxu0
    %796 = vmatprep.mubr.f32.mxu0 0.0
    %797 = vmatmul.mubr.f32.gmra.mrb[0].mxu0 %v625
    %v798 = vpop.f32.mrb[0].mxu0
    %v799 = vadd.f32 %v603, %v798
    %v800 = vpop.f32.mrb[0].mxu0
    %801 = vmatprep.mubr.f32.mxu0 0.0
    %802 = vmatmul.mubr.f32.gmra.mrb[0].mxu0 %v628
    %v803 = vpop.f32.mrb[0].mxu0
    %v804 = vadd.f32 %v603, %v803
    %v805 = vpop.f32.mrb[0].mxu0
    %806 = vmatprep.mubr.f32.mxu0 0.0
    %807 = vmatmul.mubr.f32.gmra.mrb[0].mxu0 %v631
    %v808 = vpop.f32.mrb[0].mxu0
    %v809 = vadd.f32 %v603, %v808
    %v810 = vpop.f32.mrb[0].mxu0
    %811 = vmatprep.mubr.f32.mxu0 0.0
    %812 = vmatmul.mubr.f32.gmra.mrb[0].mxu0 %v634
    %v813 = vpop.f32.mrb[0].mxu0
    %v814 = vadd.f32 %v603, %v813
    %v815 = vpop.f32.mrb[0].mxu0
    %816 = vmatprep.mubr.f32.mxu0 0.0
    %817 = vmatmul.mubr.f32.gmra.mrb[0].mxu0 %v637
    %v818 = vpop.f32.mrb[0].mxu0
    %v819 = vadd.f32 %v603, %v818
    %v820 = vpop.f32.mrb[0].mxu0
    %821 = vmatprep.mubr.f32.mxu0 0.0
    %822 = vmatmul.mubr.f32.gmra.mrb[0].mxu0 %v640
    %v823 = vpop.f32.mrb[0].mxu0
    %v824 = vadd.f32 %v603, %v823
    %v825 = vpop.f32.mrb[0].mxu0
    %826 = vmatprep.mubr.f32.mxu0 0.0
    %827 = vmatmul.mubr.f32.gmra.mrb[0].mxu0 %v643
    %v828 = vpop.f32.mrb[0].mxu0
    %v829 = vadd.f32 %v603, %v828
    %v830 = vpop.f32.mrb[0].mxu0
    %831 = vmatprep.mubr.f32.mxu0 0.0
    %832 = vmatmul.mubr.f32.gmra.mrb[0].mxu0 %v646
    %v833 = vpop.f32.mrb[0].mxu0
    %v834 = vadd.f32 %v603, %v833
    %v835 = vpop.f32.mrb[0].mxu0
    %836 = vmatprep.mubr.f32.mxu0 0.0
    %837 = vmatmul.mubr.f32.gmra.mrb[0].mxu0 %v649
    %v838 = vpop.f32.mrb[0].mxu0
    %v839 = vadd.f32 %v603, %v838
    %v840 = vpop.f32.mrb[0].mxu0
    %841 = vmatprep.mubr.f32.mxu0 0.0
    %842 = vmatmul.mubr.f32.gmra.mrb[0].mxu0 %v652
    %v843 = vpop.f32.mrb[0].mxu0
    %v844 = vadd.f32 %v603, %v843
    %v845 = vpop.f32.mrb[0].mxu0
    %846 = vmatprep.mubr.f32.mxu0 0.0
    %847 = vmatmul.mubr.f32.gmra.mrb[0].mxu0 %v655
    %v848 = vpop.f32.mrb[0].mxu0
    %v849 = vadd.f32 %v603, %v848
    %v850 = vpop.f32.mrb[0].mxu0
    %851 = vmatprep.mubr.f32.mxu0 0.0
    %852 = vmatmul.mubr.f32.gmra.mrb[0].mxu0 %v658
    %v853 = vpop.f32.mrb[0].mxu0
    %v854 = vadd.f32 %v603, %v853
    %v855 = vpop.f32.mrb[0].mxu0
    %856 = vmatprep.mubr.f32.mxu0 0.0
    %857 = vmatmul.mubr.f32.gmra.mrb[0].mxu0 %v661
    %v858 = vpop.f32.mrb[0].mxu0
    %v859 = vadd.f32 %v603, %v858
    %v860 = vpop.f32.mrb[0].mxu0
    %861 = vmatprep.mubr.f32.mxu0 0.0
    %862 = vmatmul.mubr.f32.gmra.mrb[0].mxu0 %v664
    %v863 = vpop.f32.mrb[0].mxu0
    %v864 = vadd.f32 %v603, %v863
    %v865 = vpop.f32.mrb[0].mxu0
    %866 = vmatprep.mubr.f32.mxu0 0.0
    %867 = vmatmul.mubr.f32.gmra.mrb[0].mxu0 %v667
    %v868 = vpop.f32.mrb[0].mxu0
    %v869 = vadd.f32 %v603, %v868
    %v870 = vpop.f32.mrb[0].mxu0
    %871 = vmatprep.mubr.f32.mxu0 0.0
    %872 = vmatmul.mubr.f32.gmra.mrb[0].mxu0 %v670
    %v873 = vpop.f32.mrb[0].mxu0
    %v874 = vadd.f32 %v603, %v873
    %v875 = vpop.f32.mrb[0].mxu0
    %876 = vmatprep.mubr.f32.mxu0 0.0
    %877 = vmatmul.mubr.f32.gmra.mrb[0].mxu0 %v673
    %v878 = vpop.f32.mrb[0].mxu0
    %v879 = vadd.f32 %v603, %v878
    %v880 = vpop.f32.mrb[0].mxu0
    %881 = vmatprep.mubr.f32.mxu0 0.0
    %882 = vmatmul.mubr.f32.gmra.mrb[0].mxu0 %v676
    %v883 = vpop.f32.mrb[0].mxu0
    %v884 = vadd.f32 %v603, %v883
    %v885 = vpop.f32.mrb[0].mxu0
    %886 = vmatprep.mubr.f32.mxu0 0.0
    %887 = vmatmul.mubr.f32.gmra.mrb[0].mxu0 %v679
    %v888 = vpop.f32.mrb[0].mxu0
    %v889 = vadd.f32 %v603, %v888
    %v890 = vpop.f32.mrb[0].mxu0
    %891 = vmatprep.mubr.f32.mxu0 0.0
    %892 = vmatmul.mubr.f32.gmra.mrb[0].mxu0 %v682
    %v893 = vpop.f32.mrb[0].mxu0
    %v894 = vadd.f32 %v603, %v893
    %v895 = vpop.f32.mrb[0].mxu0
    %896 = vmatprep.mubr.f32.mxu0 0.0
    %897 = vmatmul.mubr.f32.gmra.mrb[0].mxu0 %v685
    %v898 = vpop.f32.mrb[0].mxu0
    %v899 = vadd.f32 %v603, %v898
    %v900 = vpop.f32.mrb[0].mxu0
    %901 = vmatprep.mubr.f32.mxu0 0.0
    %902 = vmatmul.mubr.f32.gmra.mrb[0].mxu0 %v688
    %v903 = vpop.f32.mrb[0].mxu0
    %v904 = vadd.f32 %v603, %v903
    %v905 = vpop.f32.mrb[0].mxu0
    %906 = vmatprep.mubr.f32.mxu0 0.0
    %907 = vmatmul.mubr.f32.gmra.mrb[0].mxu0 %v691
    %v908 = vpop.f32.mrb[0].mxu0
    %v909 = vadd.f32 %v603, %v908
    %v910 = vpop.f32.mrb[0].mxu0
    %911 = vmatprep.mubr.f32.mxu0 0.0
    %912 = vmatmul.mubr.f32.gmra.mrb[0].mxu0 %v694
    %v913 = vpop.f32.mrb[0].mxu0
    %v914 = vadd.f32 %v603, %v913
    %v915 = vpop.f32.mrb[0].mxu0
    %916 = vmatprep.mubr.f32.mxu0 0.0
    %917 = vmatmul.mubr.f32.gmra.mrb[0].mxu0 %v697
    %v918 = vpop.f32.mrb[0].mxu0
    %v919 = vadd.f32 %v603, %v918
    %v920 = vpop.f32.mrb[0].mxu0
    %921 = vmatprep.mubr.f32.mxu0 0.0
    %922 = vmatmul.mubr.f32.gmra.mrb[0].mxu0 %v700
    %v923 = vpop.f32.mrb[0].mxu0
    %v924 = vadd.f32 %v603, %v923
    %v925 = vpop.f32.mrb[0].mxu0
    %926 = vdwg.mxu0
    %v927 = vmax.f32 %v769, 0.0
    %v928 = vmax.f32 %v774, 0.0
    %v929 = vmax.f32 %v779, 0.0
    %v930 = vmax.f32 %v784, 0.0
    %v931 = vmax.f32 %v789, 0.0
    %v932 = vmax.f32 %v794, 0.0
    %v933 = vmax.f32 %v799, 0.0
    %v934 = vmax.f32 %v804, 0.0
    %v935 = vmax.f32 %v809, 0.0
    %v936 = vmax.f32 %v814, 0.0
    %v937 = vmax.f32 %v819, 0.0
    %v938 = vmax.f32 %v824, 0.0
    %v939 = vmax.f32 %v829, 0.0
    %v940 = vmax.f32 %v834, 0.0
    %v941 = vmax.f32 %v839, 0.0
    %v942 = vmax.f32 %v844, 0.0
    %v943 = vmax.f32 %v849, 0.0
    %v944 = vmax.f32 %v854, 0.0
    %v945 = vmax.f32 %v859, 0.0
    %v946 = vmax.f32 %v864, 0.0
    %v947 = vmax.f32 %v869, 0.0
    %v948 = vmax.f32 %v874, 0.0
    %v949 = vmax.f32 %v879, 0.0
    %v950 = vmax.f32 %v884, 0.0
    %v951 = vmax.f32 %v889, 0.0
    %v952 = vmax.f32 %v894, 0.0
    %v953 = vmax.f32 %v899, 0.0
    %v954 = vmax.f32 %v904, 0.0
    %v955 = vmax.f32 %v909, 0.0
    %v956 = vmax.f32 %v914, 0.0
    %v957 = vmax.f32 %v919, 0.0
    %v958 = vmax.f32 %v924, 0.0
    %v959 = vld [vmem:[%s5] sm:$0xff]
    %v960 = vld [vmem:[%s5 + $0x8] sm:$0xff]
    %v961 = vld [vmem:[%s5 + $0x10] sm:$0xff]
    %v962 = vld [vmem:[%s5 + $0x18] sm:$0xff]
    %vm963 = vcmask 261120
    %v965 = vsel %vm963, %v927, 0
    %v968 = vsel %vm963, %v928, 0
    %v971 = vsel %vm963, %v929, 0
    %v974 = vsel %vm963, %v930, 0
    %v977 = vsel %vm963, %v931, 0
    %v980 = vsel %vm963, %v932, 0
    %v983 = vsel %vm963, %v933, 0
    %v986 = vsel %vm963, %v934, 0
    %v989 = vsel %vm963, %v935, 0
    %v992 = vsel %vm963, %v936, 0
    %v995 = vsel %vm963, %v937, 0
    %v998 = vsel %vm963, %v938, 0
    %v1001 = vsel %vm963, %v939, 0
    %v1004 = vsel %vm963, %v940, 0
    %v1007 = vsel %vm963, %v941, 0
    %v1010 = vsel %vm963, %v942, 0
    %v1013 = vsel %vm963, %v943, 0
    %v1016 = vsel %vm963, %v944, 0
    %v1019 = vsel %vm963, %v945, 0
    %v1022 = vsel %vm963, %v946, 0
    %v1025 = vsel %vm963, %v947, 0
    %v1028 = vsel %vm963, %v948, 0
    %v1031 = vsel %vm963, %v949, 0
    %v1034 = vsel %vm963, %v950, 0
    %v1037 = vsel %vm963, %v951, 0
    %v1040 = vsel %vm963, %v952, 0
    %v1043 = vsel %vm963, %v953, 0
    %v1046 = vsel %vm963, %v954, 0
    %v1049 = vsel %vm963, %v955, 0
    %v1052 = vsel %vm963, %v956, 0
    %v1055 = vsel %vm963, %v957, 0
    %v1058 = vsel %vm963, %v958, 0
    %1060 = vmatprep.subr.mxu0 0.0
    %1061 = vmatpush1.msra.mxu0 %v959
    %1062 = vmatprep.subr.mxu0 0.0
    %1063 = vmatpush1.msra.mxu0 %v960
    %1064 = vmatprep.subr.mxu0 0.0
    %1065 = vmatpush1.msra.mxu0 %v961
    %1066 = vmatprep.subr.mxu0 0.0
    %1067 = vmatpush1.msra.mxu0 %v962
    %1068 = vmatprep.subr.mxu0 0.0
    %1069 = vmatpush1.msra.mxu0 0.0
    %1070 = vmatprep.subr.mxu0 0.0
    %1071 = vmatpush1.msra.mxu0 0.0
    %1072 = vmatprep.subr.mxu0 0.0
    %1073 = vmatpush1.msra.mxu0 0.0
    %1074 = vmatprep.subr.mxu0 0.0
    %1075 = vmatpush1.msra.mxu0 0.0
    %1076 = vmatprep.subr.mxu0 0.0
    %1077 = vmatpush1.msra.mxu0 0.0
    %1078 = vmatprep.subr.mxu0 0.0
    %1079 = vmatpush1.msra.mxu0 0.0
    %1080 = vmatprep.subr.mxu0 0.0
    %1081 = vmatpush1.msra.mxu0 0.0
    %1082 = vmatprep.subr.mxu0 0.0
    %1083 = vmatpush1.msra.mxu0 0.0
    %1084 = vmatprep.subr.mxu0 0.0
    %1085 = vmatpush1.msra.mxu0 0.0
    %1086 = vmatprep.subr.mxu0 0.0
    %1087 = vmatpush1.msra.mxu0 0.0
    %1088 = vmatprep.subr.mxu0 0.0
    %1089 = vmatpush1.msra.mxu0 0.0
    %1090 = vmatprep.subr.mxu0 0.0
    %1091 = vmatpush1.msra.mxu0 0.0
    %1092 = vmatprep.subr.mxu0 0.0
    %1093 = vmatpush1.msra.mxu0 0.0
    %1094 = vmatprep.subr.mxu0 0.0
    %1095 = vmatpush1.msra.mxu0 0.0
    %1096 = vmatprep.subr.mxu0 0.0
    %1097 = vmatpush1.msra.mxu0 0.0
    %1098 = vmatprep.subr.mxu0 0.0
    %1099 = vmatpush1.msra.mxu0 0.0
    %1100 = vmatprep.subr.mxu0 0.0
    %1101 = vmatpush1.msra.mxu0 0.0
    %1102 = vmatprep.subr.mxu0 0.0
    %1103 = vmatpush1.msra.mxu0 0.0
    %1104 = vmatprep.subr.mxu0 0.0
    %1105 = vmatpush1.msra.mxu0 0.0
    %1106 = vmatprep.subr.mxu0 0.0
    %1107 = vmatpush1.msra.mxu0 0.0
    %1108 = vmatprep.subr.mxu0 0.0
    %1109 = vmatpush1.msra.mxu0 0.0
    %1110 = vmatprep.subr.mxu0 0.0
    %1111 = vmatpush1.msra.mxu0 0.0
    %1112 = vmatprep.subr.mxu0 0.0
    %1113 = vmatpush1.msra.mxu0 0.0
    %1114 = vmatprep.subr.mxu0 0.0
    %1115 = vmatpush1.msra.mxu0 0.0
    %1116 = vmatprep.subr.mxu0 0.0
    %1117 = vmatpush1.msra.mxu0 0.0
    %1118 = vmatprep.subr.mxu0 0.0
    %1119 = vmatpush1.msra.mxu0 0.0
    %1120 = vmatprep.subr.mxu0 0.0
    %1121 = vmatpush1.msra.mxu0 0.0
    %1122 = vmatprep.subr.mxu0 0.0
    %1123 = vmatpush1.msra.mxu0 0.0
    %1124 = vmatprep.mubr.f32.mxu0 0.0
    %1125 = vmatmul.mubr.f32.gmra.mrb[0].mxu0 %v965
    %v1126 = vpop.f32.mrb[0].mxu0
    %v1127 = vadd.f32 0.0, %v1126
    %v1128 = vpop.f32.mrb[0].mxu0
    %1129 = vmatprep.mubr.f32.mxu0 0.0
    %1130 = vmatmul.mubr.f32.gmra.mrb[0].mxu0 %v968
    %v1131 = vpop.f32.mrb[0].mxu0
    %v1132 = vadd.f32 0.0, %v1131
    %v1133 = vpop.f32.mrb[0].mxu0
    %1134 = vmatprep.mubr.f32.mxu0 0.0
    %1135 = vmatmul.mubr.f32.gmra.mrb[0].mxu0 %v971
    %v1136 = vpop.f32.mrb[0].mxu0
    %v1137 = vadd.f32 0.0, %v1136
    %v1138 = vpop.f32.mrb[0].mxu0
    %1139 = vmatprep.mubr.f32.mxu0 0.0
    %1140 = vmatmul.mubr.f32.gmra.mrb[0].mxu0 %v974
    %v1141 = vpop.f32.mrb[0].mxu0
    %v1142 = vadd.f32 0.0, %v1141
    %v1143 = vpop.f32.mrb[0].mxu0
    %1144 = vmatprep.mubr.f32.mxu0 0.0
    %1145 = vmatmul.mubr.f32.gmra.mrb[0].mxu0 %v977
    %v1146 = vpop.f32.mrb[0].mxu0
    %v1147 = vadd.f32 0.0, %v1146
    %v1148 = vpop.f32.mrb[0].mxu0
    %1149 = vmatprep.mubr.f32.mxu0 0.0
    %1150 = vmatmul.mubr.f32.gmra.mrb[0].mxu0 %v980
    %v1151 = vpop.f32.mrb[0].mxu0
    %v1152 = vadd.f32 0.0, %v1151
    %v1153 = vpop.f32.mrb[0].mxu0
    %1154 = vmatprep.mubr.f32.mxu0 0.0
    %1155 = vmatmul.mubr.f32.gmra.mrb[0].mxu0 %v983
    %v1156 = vpop.f32.mrb[0].mxu0
    %v1157 = vadd.f32 0.0, %v1156
    %v1158 = vpop.f32.mrb[0].mxu0
    %1159 = vmatprep.mubr.f32.mxu0 0.0
    %1160 = vmatmul.mubr.f32.gmra.mrb[0].mxu0 %v986
    %v1161 = vpop.f32.mrb[0].mxu0
    %v1162 = vadd.f32 0.0, %v1161
    %v1163 = vpop.f32.mrb[0].mxu0
    %1164 = vmatprep.mubr.f32.mxu0 0.0
    %1165 = vmatmul.mubr.f32.gmra.mrb[0].mxu0 %v989
    %v1166 = vpop.f32.mrb[0].mxu0
    %v1167 = vadd.f32 0.0, %v1166
    %v1168 = vpop.f32.mrb[0].mxu0
    %1169 = vmatprep.mubr.f32.mxu0 0.0
    %1170 = vmatmul.mubr.f32.gmra.mrb[0].mxu0 %v992
    %v1171 = vpop.f32.mrb[0].mxu0
    %v1172 = vadd.f32 0.0, %v1171
    %v1173 = vpop.f32.mrb[0].mxu0
    %1174 = vmatprep.mubr.f32.mxu0 0.0
    %1175 = vmatmul.mubr.f32.gmra.mrb[0].mxu0 %v995
    %v1176 = vpop.f32.mrb[0].mxu0
    %v1177 = vadd.f32 0.0, %v1176
    %v1178 = vpop.f32.mrb[0].mxu0
    %1179 = vmatprep.mubr.f32.mxu0 0.0
    %1180 = vmatmul.mubr.f32.gmra.mrb[0].mxu0 %v998
    %v1181 = vpop.f32.mrb[0].mxu0
    %v1182 = vadd.f32 0.0, %v1181
    %v1183 = vpop.f32.mrb[0].mxu0
    %1184 = vmatprep.mubr.f32.mxu0 0.0
    %1185 = vmatmul.mubr.f32.gmra.mrb[0].mxu0 %v1001
    %v1186 = vpop.f32.mrb[0].mxu0
    %v1187 = vadd.f32 0.0, %v1186
    %v1188 = vpop.f32.mrb[0].mxu0
    %1189 = vmatprep.mubr.f32.mxu0 0.0
    %1190 = vmatmul.mubr.f32.gmra.mrb[0].mxu0 %v1004
    %v1191 = vpop.f32.mrb[0].mxu0
    %v1192 = vadd.f32 0.0, %v1191
    %v1193 = vpop.f32.mrb[0].mxu0
    %1194 = vmatprep.mubr.f32.mxu0 0.0
    %1195 = vmatmul.mubr.f32.gmra.mrb[0].mxu0 %v1007
    %v1196 = vpop.f32.mrb[0].mxu0
    %v1197 = vadd.f32 0.0, %v1196
    %v1198 = vpop.f32.mrb[0].mxu0
    %1199 = vmatprep.mubr.f32.mxu0 0.0
    %1200 = vmatmul.mubr.f32.gmra.mrb[0].mxu0 %v1010
    %v1201 = vpop.f32.mrb[0].mxu0
    %v1202 = vadd.f32 0.0, %v1201
    %v1203 = vpop.f32.mrb[0].mxu0
    %1204 = vmatprep.mubr.f32.mxu0 0.0
    %1205 = vmatmul.mubr.f32.gmra.mrb[0].mxu0 %v1013
    %v1206 = vpop.f32.mrb[0].mxu0
    %v1207 = vadd.f32 0.0, %v1206
    %v1208 = vpop.f32.mrb[0].mxu0
    %1209 = vmatprep.mubr.f32.mxu0 0.0
    %1210 = vmatmul.mubr.f32.gmra.mrb[0].mxu0 %v1016
    %v1211 = vpop.f32.mrb[0].mxu0
    %v1212 = vadd.f32 0.0, %v1211
    %v1213 = vpop.f32.mrb[0].mxu0
    %1214 = vmatprep.mubr.f32.mxu0 0.0
    %1215 = vmatmul.mubr.f32.gmra.mrb[0].mxu0 %v1019
    %v1216 = vpop.f32.mrb[0].mxu0
    %v1217 = vadd.f32 0.0, %v1216
    %v1218 = vpop.f32.mrb[0].mxu0
    %1219 = vmatprep.mubr.f32.mxu0 0.0
    %1220 = vmatmul.mubr.f32.gmra.mrb[0].mxu0 %v1022
    %v1221 = vpop.f32.mrb[0].mxu0
    %v1222 = vadd.f32 0.0, %v1221
    %v1223 = vpop.f32.mrb[0].mxu0
    %1224 = vmatprep.mubr.f32.mxu0 0.0
    %1225 = vmatmul.mubr.f32.gmra.mrb[0].mxu0 %v1025
    %v1226 = vpop.f32.mrb[0].mxu0
    %v1227 = vadd.f32 0.0, %v1226
    %v1228 = vpop.f32.mrb[0].mxu0
    %1229 = vmatprep.mubr.f32.mxu0 0.0
    %1230 = vmatmul.mubr.f32.gmra.mrb[0].mxu0 %v1028
    %v1231 = vpop.f32.mrb[0].mxu0
    %v1232 = vadd.f32 0.0, %v1231
    %v1233 = vpop.f32.mrb[0].mxu0
    %1234 = vmatprep.mubr.f32.mxu0 0.0
    %1235 = vmatmul.mubr.f32.gmra.mrb[0].mxu0 %v1031
    %v1236 = vpop.f32.mrb[0].mxu0
    %v1237 = vadd.f32 0.0, %v1236
    %v1238 = vpop.f32.mrb[0].mxu0
    %1239 = vmatprep.mubr.f32.mxu0 0.0
    %1240 = vmatmul.mubr.f32.gmra.mrb[0].mxu0 %v1034
    %v1241 = vpop.f32.mrb[0].mxu0
    %v1242 = vadd.f32 0.0, %v1241
    %v1243 = vpop.f32.mrb[0].mxu0
    %1244 = vmatprep.mubr.f32.mxu0 0.0
    %1245 = vmatmul.mubr.f32.gmra.mrb[0].mxu0 %v1037
    %v1246 = vpop.f32.mrb[0].mxu0
    %v1247 = vadd.f32 0.0, %v1246
    %v1248 = vpop.f32.mrb[0].mxu0
    %1249 = vmatprep.mubr.f32.mxu0 0.0
    %1250 = vmatmul.mubr.f32.gmra.mrb[0].mxu0 %v1040
    %v1251 = vpop.f32.mrb[0].mxu0
    %v1252 = vadd.f32 0.0, %v1251
    %v1253 = vpop.f32.mrb[0].mxu0
    %1254 = vmatprep.mubr.f32.mxu0 0.0
    %1255 = vmatmul.mubr.f32.gmra.mrb[0].mxu0 %v1043
    %v1256 = vpop.f32.mrb[0].mxu0
    %v1257 = vadd.f32 0.0, %v1256
    %v1258 = vpop.f32.mrb[0].mxu0
    %1259 = vmatprep.mubr.f32.mxu0 0.0
    %1260 = vmatmul.mubr.f32.gmra.mrb[0].mxu0 %v1046
    %v1261 = vpop.f32.mrb[0].mxu0
    %v1262 = vadd.f32 0.0, %v1261
    %v1263 = vpop.f32.mrb[0].mxu0
    %1264 = vmatprep.mubr.f32.mxu0 0.0
    %1265 = vmatmul.mubr.f32.gmra.mrb[0].mxu0 %v1049
    %v1266 = vpop.f32.mrb[0].mxu0
    %v1267 = vadd.f32 0.0, %v1266
    %v1268 = vpop.f32.mrb[0].mxu0
    %1269 = vmatprep.mubr.f32.mxu0 0.0
    %1270 = vmatmul.mubr.f32.gmra.mrb[0].mxu0 %v1052
    %v1271 = vpop.f32.mrb[0].mxu0
    %v1272 = vadd.f32 0.0, %v1271
    %v1273 = vpop.f32.mrb[0].mxu0
    %1274 = vmatprep.mubr.f32.mxu0 0.0
    %1275 = vmatmul.mubr.f32.gmra.mrb[0].mxu0 %v1055
    %v1276 = vpop.f32.mrb[0].mxu0
    %v1277 = vadd.f32 0.0, %v1276
    %v1278 = vpop.f32.mrb[0].mxu0
    %1279 = vmatprep.mubr.f32.mxu0 0.0
    %1280 = vmatmul.mubr.f32.gmra.mrb[0].mxu0 %v1058
    %v1281 = vpop.f32.mrb[0].mxu0
    %v1282 = vadd.f32 0.0, %v1281
    %v1283 = vpop.f32.mrb[0].mxu0
    %1284 = vdwg.mxu0
    %v1285 = vmul.f32 %v1127, %v408
    %v1286 = vmul.f32 %v1132, %v413
    %v1287 = vmul.f32 %v1137, %v418
    %v1288 = vmul.f32 %v1142, %v423
    %v1289 = vmul.f32 %v1147, %v428
    %v1290 = vmul.f32 %v1152, %v433
    %v1291 = vmul.f32 %v1157, %v438
    %v1292 = vmul.f32 %v1162, %v443
    %v1293 = vmul.f32 %v1167, %v448
    %v1294 = vmul.f32 %v1172, %v453
    %v1295 = vmul.f32 %v1177, %v458
    %v1296 = vmul.f32 %v1182, %v463
    %v1297 = vmul.f32 %v1187, %v468
    %v1298 = vmul.f32 %v1192, %v473
    %v1299 = vmul.f32 %v1197, %v478
    %v1300 = vmul.f32 %v1202, %v483
    %v1301 = vmul.f32 %v1207, %v488
    %v1302 = vmul.f32 %v1212, %v493
    %v1303 = vmul.f32 %v1217, %v498
    %v1304 = vmul.f32 %v1222, %v503
    %v1305 = vmul.f32 %v1227, %v508
    %v1306 = vmul.f32 %v1232, %v513
    %v1307 = vmul.f32 %v1237, %v518
    %v1308 = vmul.f32 %v1242, %v523
    %v1309 = vmul.f32 %v1247, %v528
    %v1310 = vmul.f32 %v1252, %v533
    %v1311 = vmul.f32 %v1257, %v538
    %v1312 = vmul.f32 %v1262, %v543
    %v1313 = vmul.f32 %v1267, %v548
    %v1314 = vmul.f32 %v1272, %v553
    %v1315 = vmul.f32 %v1277, %v558
    %v1316 = vmul.f32 %v1282, %v563
    %v1317 = vpack.c.bf16 %v1286, %v1285
    %v1318 = vpack.c.bf16 %v1288, %v1287
    %v1319 = vpack.c.bf16 %v1290, %v1289
    %v1320 = vpack.c.bf16 %v1292, %v1291
    %v1321 = vpack.c.bf16 %v1294, %v1293
    %v1322 = vpack.c.bf16 %v1296, %v1295
    %v1323 = vpack.c.bf16 %v1298, %v1297
    %v1324 = vpack.c.bf16 %v1300, %v1299
    %v1325 = vpack.c.bf16 %v1302, %v1301
    %v1326 = vpack.c.bf16 %v1304, %v1303
    %v1327 = vpack.c.bf16 %v1306, %v1305
    %v1328 = vpack.c.bf16 %v1308, %v1307
    %v1329 = vpack.c.bf16 %v1310, %v1309
    %v1330 = vpack.c.bf16 %v1312, %v1311
    %v1331 = vpack.c.bf16 %v1314, %v1313
    %v1332 = vpack.c.bf16 %v1316, %v1315
    %1333 = vmatprep.subr.bf16.mxu0 0
    %1334 = vmatpush1.bf16.msra.mxu0 %v1317
    %1335 = vmatprep.subr.bf16.mxu0 0
    %1336 = vmatpush1.bf16.msra.mxu0 %v1318
    %1337 = vmatprep.subr.bf16.mxu0 0
    %1338 = vmatpush1.bf16.msra.mxu0 %v1319
    %1339 = vmatprep.subr.bf16.mxu0 0
    %1340 = vmatpush1.bf16.msra.mxu0 %v1320
    %1341 = vmatprep.subr.bf16.mxu0 0
    %1342 = vmatpush1.bf16.msra.mxu0 %v1321
    %1343 = vmatprep.subr.bf16.mxu0 0
    %1344 = vmatpush1.bf16.msra.mxu0 %v1322
    %1345 = vmatprep.subr.bf16.mxu0 0
    %1346 = vmatpush1.bf16.msra.mxu0 %v1323
    %1347 = vmatprep.subr.bf16.mxu0 0
    %1348 = vmatpush1.bf16.msra.mxu0 %v1324
    %1349 = vmatprep.subr.bf16.mxu0 0
    %1350 = vmatpush1.bf16.msra.mxu0 %v1325
    %1351 = vmatprep.subr.bf16.mxu0 0
    %1352 = vmatpush1.bf16.msra.mxu0 %v1326
    %1353 = vmatprep.subr.bf16.mxu0 0
    %1354 = vmatpush1.bf16.msra.mxu0 %v1327
    %1355 = vmatprep.subr.bf16.mxu0 0
    %1356 = vmatpush1.bf16.msra.mxu0 %v1328
    %1357 = vmatprep.subr.bf16.mxu0 0
    %1358 = vmatpush1.bf16.msra.mxu0 %v1329
    %1359 = vmatprep.subr.bf16.mxu0 0
    %1360 = vmatpush1.bf16.msra.mxu0 %v1330
    %1361 = vmatprep.subr.bf16.mxu0 0
    %1362 = vmatpush1.bf16.msra.mxu0 %v1331
    %1363 = vmatprep.subr.bf16.mxu0 0
    %1364 = vmatpush1.bf16.msra.mxu0 %v1332
    %1365 = vmatprep.mubr.bf16.mxu0 %v53
    %1366 = vmatmul.mubr.bf16.gmra.mrb[0].mxu0 %v52
    %v1367 = vpop.f32.mrb[0].mxu0
    %v1368 = vadd.f32 0.0, %v1367
    %v1369 = vpop.f32.mrb[0].mxu0
    %v1370 = vpop.f32.mrb[0].mxu0
    %v1371 = vadd.f32 0.0, %v1370
    %v1372 = vpop.f32.mrb[0].mxu0
    %1373 = vmatprep.mubr.bf16.mxu0 %v55
    %1374 = vmatmul.mubr.bf16.gmra.mrb[0].mxu0 %v54
    %v1375 = vpop.f32.mrb[0].mxu0
    %v1376 = vadd.f32 0.0, %v1375
    %v1377 = vpop.f32.mrb[0].mxu0
    %v1378 = vpop.f32.mrb[0].mxu0
    %v1379 = vadd.f32 0.0, %v1378
    %v1380 = vpop.f32.mrb[0].mxu0
    %1381 = vmatprep.mubr.bf16.mxu0 %v57
    %1382 = vmatmul.mubr.bf16.gmra.mrb[0].mxu0 %v56
    %v1383 = vpop.f32.mrb[0].mxu0
    %v1384 = vadd.f32 0.0, %v1383
    %v1385 = vpop.f32.mrb[0].mxu0
    %v1386 = vpop.f32.mrb[0].mxu0
    %v1387 = vadd.f32 0.0, %v1386
    %v1388 = vpop.f32.mrb[0].mxu0
    %1389 = vmatprep.mubr.bf16.mxu0 %v59
    %1390 = vmatmul.mubr.bf16.gmra.mrb[0].mxu0 %v58
    %v1391 = vpop.f32.mrb[0].mxu0
    %v1392 = vadd.f32 0.0, %v1391
    %v1393 = vpop.f32.mrb[0].mxu0
    %v1394 = vpop.f32.mrb[0].mxu0
    %v1395 = vadd.f32 0.0, %v1394
    %v1396 = vpop.f32.mrb[0].mxu0
    %1397 = vmatprep.mubr.bf16.mxu0 %v61
    %1398 = vmatmul.mubr.bf16.gmra.mrb[0].mxu0 %v60
    %v1399 = vpop.f32.mrb[0].mxu0
    %v1400 = vadd.f32 0.0, %v1399
    %v1401 = vpop.f32.mrb[0].mxu0
    %v1402 = vpop.f32.mrb[0].mxu0
    %v1403 = vadd.f32 0.0, %v1402
    %v1404 = vpop.f32.mrb[0].mxu0
    %1405 = vmatprep.mubr.bf16.mxu0 %v63
    %1406 = vmatmul.mubr.bf16.gmra.mrb[0].mxu0 %v62
    %v1407 = vpop.f32.mrb[0].mxu0
    %v1408 = vadd.f32 0.0, %v1407
    %v1409 = vpop.f32.mrb[0].mxu0
    %v1410 = vpop.f32.mrb[0].mxu0
    %v1411 = vadd.f32 0.0, %v1410
    %v1412 = vpop.f32.mrb[0].mxu0
    %1413 = vmatprep.mubr.bf16.mxu0 %v65
    %1414 = vmatmul.mubr.bf16.gmra.mrb[0].mxu0 %v64
    %v1415 = vpop.f32.mrb[0].mxu0
    %v1416 = vadd.f32 0.0, %v1415
    %v1417 = vpop.f32.mrb[0].mxu0
    %v1418 = vpop.f32.mrb[0].mxu0
    %v1419 = vadd.f32 0.0, %v1418
    %v1420 = vpop.f32.mrb[0].mxu0
    %1421 = vmatprep.mubr.bf16.mxu0 %v67
    %1422 = vmatmul.mubr.bf16.gmra.mrb[0].mxu0 %v66
    %v1423 = vpop.f32.mrb[0].mxu0
    %v1424 = vadd.f32 0.0, %v1423
    %v1425 = vpop.f32.mrb[0].mxu0
    %v1426 = vpop.f32.mrb[0].mxu0
    %v1427 = vadd.f32 0.0, %v1426
    %v1428 = vpop.f32.mrb[0].mxu0
    %1429 = vmatprep.mubr.bf16.mxu0 %v69
    %1430 = vmatmul.mubr.bf16.gmra.mrb[0].mxu0 %v68
    %v1431 = vpop.f32.mrb[0].mxu0
    %v1432 = vadd.f32 0.0, %v1431
    %v1433 = vpop.f32.mrb[0].mxu0
    %v1434 = vpop.f32.mrb[0].mxu0
    %v1435 = vadd.f32 0.0, %v1434
    %v1436 = vpop.f32.mrb[0].mxu0
    %1437 = vmatprep.mubr.bf16.mxu0 %v71
    %1438 = vmatmul.mubr.bf16.gmra.mrb[0].mxu0 %v70
    %v1439 = vpop.f32.mrb[0].mxu0
    %v1440 = vadd.f32 0.0, %v1439
    %v1441 = vpop.f32.mrb[0].mxu0
    %v1442 = vpop.f32.mrb[0].mxu0
    %v1443 = vadd.f32 0.0, %v1442
    %v1444 = vpop.f32.mrb[0].mxu0
    %1445 = vmatprep.mubr.bf16.mxu0 %v73
    %1446 = vmatmul.mubr.bf16.gmra.mrb[0].mxu0 %v72
    %v1447 = vpop.f32.mrb[0].mxu0
    %v1448 = vadd.f32 0.0, %v1447
    %v1449 = vpop.f32.mrb[0].mxu0
    %v1450 = vpop.f32.mrb[0].mxu0
    %v1451 = vadd.f32 0.0, %v1450
    %v1452 = vpop.f32.mrb[0].mxu0
    %1453 = vmatprep.mubr.bf16.mxu0 %v75
    %1454 = vmatmul.mubr.bf16.gmra.mrb[0].mxu0 %v74
    %v1455 = vpop.f32.mrb[0].mxu0
    %v1456 = vadd.f32 0.0, %v1455
    %v1457 = vpop.f32.mrb[0].mxu0
    %v1458 = vpop.f32.mrb[0].mxu0
    %v1459 = vadd.f32 0.0, %v1458
    %v1460 = vpop.f32.mrb[0].mxu0
    %1461 = vmatprep.mubr.bf16.mxu0 %v77
    %1462 = vmatmul.mubr.bf16.gmra.mrb[0].mxu0 %v76
    %v1463 = vpop.f32.mrb[0].mxu0
    %v1464 = vadd.f32 0.0, %v1463
    %v1465 = vpop.f32.mrb[0].mxu0
    %v1466 = vpop.f32.mrb[0].mxu0
    %v1467 = vadd.f32 0.0, %v1466
    %v1468 = vpop.f32.mrb[0].mxu0
    %1469 = vmatprep.mubr.bf16.mxu0 %v79
    %1470 = vmatmul.mubr.bf16.gmra.mrb[0].mxu0 %v78
    %v1471 = vpop.f32.mrb[0].mxu0
    %v1472 = vadd.f32 0.0, %v1471
    %v1473 = vpop.f32.mrb[0].mxu0
    %v1474 = vpop.f32.mrb[0].mxu0
    %v1475 = vadd.f32 0.0, %v1474
    %v1476 = vpop.f32.mrb[0].mxu0
    %1477 = vmatprep.mubr.bf16.mxu0 %v81
    %1478 = vmatmul.mubr.bf16.gmra.mrb[0].mxu0 %v80
    %v1479 = vpop.f32.mrb[0].mxu0
    %v1480 = vadd.f32 0.0, %v1479
    %v1481 = vpop.f32.mrb[0].mxu0
    %v1482 = vpop.f32.mrb[0].mxu0
    %v1483 = vadd.f32 0.0, %v1482
    %v1484 = vpop.f32.mrb[0].mxu0
    %1485 = vmatprep.mubr.bf16.mxu0 %v83
    %1486 = vmatmul.mubr.bf16.gmra.mrb[0].mxu0 %v82
    %v1487 = vpop.f32.mrb[0].mxu0
    %v1488 = vadd.f32 0.0, %v1487
    %v1489 = vpop.f32.mrb[0].mxu0
    %v1490 = vpop.f32.mrb[0].mxu0
    %v1491 = vadd.f32 0.0, %v1490
    %v1492 = vpop.f32.mrb[0].mxu0
    %1493 = vdwg.mxu0
    %v1494 = vmul.f32 %v1368, %v408
    %v1495 = vmul.f32 %v1371, %v413
    %v1496 = vmul.f32 %v1376, %v418
    %v1497 = vmul.f32 %v1379, %v423
    %v1498 = vmul.f32 %v1384, %v428
    %v1499 = vmul.f32 %v1387, %v433
    %v1500 = vmul.f32 %v1392, %v438
    %v1501 = vmul.f32 %v1395, %v443
    %v1502 = vmul.f32 %v1400, %v448
    %v1503 = vmul.f32 %v1403, %v453
    %v1504 = vmul.f32 %v1408, %v458
    %v1505 = vmul.f32 %v1411, %v463
    %v1506 = vmul.f32 %v1416, %v468
    %v1507 = vmul.f32 %v1419, %v473
    %v1508 = vmul.f32 %v1424, %v478
    %v1509 = vmul.f32 %v1427, %v483
    %v1510 = vmul.f32 %v1432, %v488
    %v1511 = vmul.f32 %v1435, %v493
    %v1512 = vmul.f32 %v1440, %v498
    %v1513 = vmul.f32 %v1443, %v503
    %v1514 = vmul.f32 %v1448, %v508
    %v1515 = vmul.f32 %v1451, %v513
    %v1516 = vmul.f32 %v1456, %v518
    %v1517 = vmul.f32 %v1459, %v523
    %v1518 = vmul.f32 %v1464, %v528
    %v1519 = vmul.f32 %v1467, %v533
    %v1520 = vmul.f32 %v1472, %v538
    %v1521 = vmul.f32 %v1475, %v543
    %v1522 = vmul.f32 %v1480, %v548
    %v1523 = vmul.f32 %v1483, %v553
    %v1524 = vmul.f32 %v1488, %v558
    %v1525 = vmul.f32 %v1491, %v563
    %v1526 = vld [vmem:[%s6] sm:$0x1]
    %v1528 = vlaneseq
    %v1529 = vshrl.u32 %v1528, 7
    %v1530 = vsub.s32 0, %v1529
    %v1531 = vrot.slane %v1526, %v1530
    %v1533 = vadd.f32 %v1494, %v1531
    %v1534 = vadd.f32 %v1495, %v1531
    %v1535 = vadd.f32 %v1496, %v1531
    %v1536 = vadd.f32 %v1497, %v1531
    %v1537 = vadd.f32 %v1498, %v1531
    %v1538 = vadd.f32 %v1499, %v1531
    %v1539 = vadd.f32 %v1500, %v1531
    %v1540 = vadd.f32 %v1501, %v1531
    %v1541 = vadd.f32 %v1502, %v1531
    %v1542 = vadd.f32 %v1503, %v1531
    %v1543 = vadd.f32 %v1504, %v1531
    %v1544 = vadd.f32 %v1505, %v1531
    %v1545 = vadd.f32 %v1506, %v1531
    %v1546 = vadd.f32 %v1507, %v1531
    %v1547 = vadd.f32 %v1508, %v1531
    %v1548 = vadd.f32 %v1509, %v1531
    %v1549 = vadd.f32 %v1510, %v1531
    %v1550 = vadd.f32 %v1511, %v1531
    %v1551 = vadd.f32 %v1512, %v1531
    %v1552 = vadd.f32 %v1513, %v1531
    %v1553 = vadd.f32 %v1514, %v1531
    %v1554 = vadd.f32 %v1515, %v1531
    %v1555 = vadd.f32 %v1516, %v1531
    %v1556 = vadd.f32 %v1517, %v1531
    %v1557 = vadd.f32 %v1518, %v1531
    %v1558 = vadd.f32 %v1519, %v1531
    %v1559 = vadd.f32 %v1520, %v1531
    %v1560 = vadd.f32 %v1521, %v1531
    %v1561 = vadd.f32 %v1522, %v1531
    %v1562 = vadd.f32 %v1523, %v1531
    %v1563 = vadd.f32 %v1524, %v1531
    %v1564 = vadd.f32 %v1525, %v1531
    %v1565 = vmax.f32 %v1533, 0.0
    %v1566 = vmax.f32 %v1534, 0.0
    %v1567 = vmax.f32 %v1535, 0.0
    %v1568 = vmax.f32 %v1536, 0.0
    %v1569 = vmax.f32 %v1537, 0.0
    %v1570 = vmax.f32 %v1538, 0.0
    %v1571 = vmax.f32 %v1539, 0.0
    %v1572 = vmax.f32 %v1540, 0.0
    %v1573 = vmax.f32 %v1541, 0.0
    %v1574 = vmax.f32 %v1542, 0.0
    %v1575 = vmax.f32 %v1543, 0.0
    %v1576 = vmax.f32 %v1544, 0.0
    %v1577 = vmax.f32 %v1545, 0.0
    %v1578 = vmax.f32 %v1546, 0.0
    %v1579 = vmax.f32 %v1547, 0.0
    %v1580 = vmax.f32 %v1548, 0.0
    %v1581 = vmax.f32 %v1549, 0.0
    %v1582 = vmax.f32 %v1550, 0.0
    %v1583 = vmax.f32 %v1551, 0.0
    %v1584 = vmax.f32 %v1552, 0.0
    %v1585 = vmax.f32 %v1553, 0.0
    %v1586 = vmax.f32 %v1554, 0.0
    %v1587 = vmax.f32 %v1555, 0.0
    %v1588 = vmax.f32 %v1556, 0.0
    %v1589 = vmax.f32 %v1557, 0.0
    %v1590 = vmax.f32 %v1558, 0.0
    %v1591 = vmax.f32 %v1559, 0.0
    %v1592 = vmax.f32 %v1560, 0.0
    %v1593 = vmax.f32 %v1561, 0.0
    %v1594 = vmax.f32 %v1562, 0.0
    %v1595 = vmax.f32 %v1563, 0.0
    %v1596 = vmax.f32 %v1564, 0.0
    %v1597 = vld [vmem:[%s7] sm:$0x1]
    %v1598 = vld [vmem:[#allocation2] sm:$0x1]
    %1600 = vset.pattern.permute.xlu0 0
    %1601 = vperm.xlu0 %1600, %v1598
    %v1602 = vpop.permute.xlu0 %1601
    %v1604 = vlaneseq
    %v1605 = vshrl.u32 %v1604, 7
    %v1606 = vsub.s32 0, %v1605
    %v1607 = vrot.slane %v1602, %v1606
    %vm1608 = vcmask 130048
    %v1610 = vsel %vm1608, %v1597, 0
    %v1613 = vsel %vm1608, %v1565, 0
    %v1616 = vsel %vm1608, %v1566, 0
    %v1619 = vsel %vm1608, %v1567, 0
    %v1622 = vsel %vm1608, %v1568, 0
    %v1625 = vsel %vm1608, %v1569, 0
    %v1628 = vsel %vm1608, %v1570, 0
    %v1631 = vsel %vm1608, %v1571, 0
    %v1634 = vsel %vm1608, %v1572, 0
    %v1637 = vsel %vm1608, %v1573, 0
    %v1640 = vsel %vm1608, %v1574, 0
    %v1643 = vsel %vm1608, %v1575, 0
    %v1646 = vsel %vm1608, %v1576, 0
    %v1649 = vsel %vm1608, %v1577, 0
    %v1652 = vsel %vm1608, %v1578, 0
    %v1655 = vsel %vm1608, %v1579, 0
    %v1658 = vsel %vm1608, %v1580, 0
    %v1661 = vsel %vm1608, %v1581, 0
    %v1664 = vsel %vm1608, %v1582, 0
    %v1667 = vsel %vm1608, %v1583, 0
    %v1670 = vsel %vm1608, %v1584, 0
    %v1673 = vsel %vm1608, %v1585, 0
    %v1676 = vsel %vm1608, %v1586, 0
    %v1679 = vsel %vm1608, %v1587, 0
    %v1682 = vsel %vm1608, %v1588, 0
    %v1685 = vsel %vm1608, %v1589, 0
    %v1688 = vsel %vm1608, %v1590, 0
    %v1691 = vsel %vm1608, %v1591, 0
    %v1694 = vsel %vm1608, %v1592, 0
    %v1697 = vsel %vm1608, %v1593, 0
    %v1700 = vsel %vm1608, %v1594, 0
    %v1703 = vsel %vm1608, %v1595, 0
    %v1706 = vsel %vm1608, %v1596, 0
    %1708 = vmatprep.subr.mxu0 0.0
    %1709 = vmatpush1.xpose.msra.mxu0 %v1613
    %1710 = vmatprep.subr.mxu0 0.0
    %1711 = vmatpush1.xpose.msra.mxu0 %v1616
    %1712 = vmatprep.subr.mxu0 0.0
    %1713 = vmatpush1.xpose.msra.mxu0 %v1619
    %1714 = vmatprep.subr.mxu0 0.0
    %1715 = vmatpush1.xpose.msra.mxu0 %v1622
    %1716 = vmatprep.subr.mxu0 0.0
    %1717 = vmatpush1.xpose.msra.mxu0 %v1625
    %1718 = vmatprep.subr.mxu0 0.0
    %1719 = vmatpush1.xpose.msra.mxu0 %v1628
    %1720 = vmatprep.subr.mxu0 0.0
    %1721 = vmatpush1.xpose.msra.mxu0 %v1631
    %1722 = vmatprep.subr.mxu0 0.0
    %1723 = vmatpush1.xpose.msra.mxu0 %v1634
    %1724 = vmatprep.subr.mxu0 0.0
    %1725 = vmatpush1.xpose.msra.mxu0 %v1637
    %1726 = vmatprep.subr.mxu0 0.0
    %1727 = vmatpush1.xpose.msra.mxu0 %v1640
    %1728 = vmatprep.subr.mxu0 0.0
    %1729 = vmatpush1.xpose.msra.mxu0 %v1643
    %1730 = vmatprep.subr.mxu0 0.0
    %1731 = vmatpush1.xpose.msra.mxu0 %v1646
    %1732 = vmatprep.subr.mxu0 0.0
    %1733 = vmatpush1.xpose.msra.mxu0 %v1649
    %1734 = vmatprep.subr.mxu0 0.0
    %1735 = vmatpush1.xpose.msra.mxu0 %v1652
    %1736 = vmatprep.subr.mxu0 0.0
    %1737 = vmatpush1.xpose.msra.mxu0 %v1655
    %1738 = vmatprep.subr.mxu0 0.0
    %1739 = vmatpush1.xpose.msra.mxu0 %v1658
    %1740 = vmatprep.subr.mxu0 0.0
    %1741 = vmatpush1.xpose.msra.mxu0 %v1661
    %1742 = vmatprep.subr.mxu0 0.0
    %1743 = vmatpush1.xpose.msra.mxu0 %v1664
    %1744 = vmatprep.subr.mxu0 0.0
    %1745 = vmatpush1.xpose.msra.mxu0 %v1667
    %1746 = vmatprep.subr.mxu0 0.0
    %1747 = vmatpush1.xpose.msra.mxu0 %v1670
    %1748 = vmatprep.subr.mxu0 0.0
    %1749 = vmatpush1.xpose.msra.mxu0 %v1673
    %1750 = vmatprep.subr.mxu0 0.0
    %1751 = vmatpush1.xpose.msra.mxu0 %v1676
    %1752 = vmatprep.subr.mxu0 0.0
    %1753 = vmatpush1.xpose.msra.mxu0 %v1679
    %1754 = vmatprep.subr.mxu0 0.0
    %1755 = vmatpush1.xpose.msra.mxu0 %v1682
    %1756 = vmatprep.subr.mxu0 0.0
    %1757 = vmatpush1.xpose.msra.mxu0 %v1685
    %1758 = vmatprep.subr.mxu0 0.0
    %1759 = vmatpush1.xpose.msra.mxu0 %v1688
    %1760 = vmatprep.subr.mxu0 0.0
    %1761 = vmatpush1.xpose.msra.mxu0 %v1691
    %1762 = vmatprep.subr.mxu0 0.0
    %1763 = vmatpush1.xpose.msra.mxu0 %v1694
    %1764 = vmatprep.subr.mxu0 0.0
    %1765 = vmatpush1.xpose.msra.mxu0 %v1697
    %1766 = vmatprep.subr.mxu0 0.0
    %1767 = vmatpush1.xpose.msra.mxu0 %v1700
    %1768 = vmatprep.subr.mxu0 0.0
    %1769 = vmatpush1.xpose.msra.mxu0 %v1703
    %1770 = vmatprep.subr.mxu0 0.0
    %1771 = vmatpush1.xpose.msra.mxu0 %v1706
    %1772 = vmatprep.mubr.f32.mxu0 0.0
    %1773 = vmatmul.mubr.f32.gmra.mrb[0].mxu0 %v1610
    %v1774 = vpop.f32.mrb[0].mxu0
    %v1775 = vadd.f32 %v1607, %v1774
    %v1776 = vpop.f32.mrb[0].mxu0
    %v1777 = vadd.f32 %v1607, %v1776
    %1778 = vdwg.mxu0
    %v1781 = vcombine.low %v1775, %v1777
    %v1783 = vunpack.c.l.s4 1966171168
    %v1784 = vunpack.c.0.s8 %v1783
    %v1785 = vlaneseq
    %v1786 = vshrl.u32 %v1785, 7
    %v1787 = vsub.s32 %v1784, %v1786
    %v1788 = vrot.slane %v1781, %v1787
    %v1790 = vunpack.c.l.s4 1966171168
    %v1791 = vunpack.c.0.s8 %v1790
    %v1792 = vlaneseq
    %v1793 = vshrl.u32 %v1792, 7
    %v1794 = vsub.s32 %v1791, %v1793
    %v1795 = vrot.slane %v1788, %v1794
    %v1797 = vlaneseq
    %vm1798 = vcmp.ge.s32.totalorder %v1797, 0
    %vm1799 = vcmp.lt.s32.totalorder %v1797, 256
    %vm1800 = vmand %vm1798, %vm1799
    %1801 = vst.msk [vmem:[#allocation3] sm:$0x3] %vm1800, %v1795
    // Predicated region
    $region38: #{tpu_custom_call.1} parent=1 // pred_check
      _
    $region39: #{tpu_custom_call.1} parent=1 // pred_check_branch
      %1803 = sbr.rel (0) target = $region41
    $region40: #{tpu_custom_call.1} parent=1 // pred_region
      %s1805 = ssub.s32 32, 32
      %1806 = vsyncadd [#allocation4], %s1805
      %s1808 = sshll.u32 [#allocation3], 4
      %s1809 = int_to_ptr.vmem [resolvable:$true] %s1808
      %1811 = dma.vmem_to_hbm [thread:$0]  %s1809, 32, %s9, [#allocation4]
    $region41: #{tpu_custom_call.1} parent=1 // pred_fallthru
      _
    // Predicated region
    $region42: #{tpu_custom_call.1} parent=1 // pred_check
      _
    $region43: #{tpu_custom_call.1} parent=1 // pred_check_branch
      %1813 = sbr.rel (0) target = $region45
    $region44: #{tpu_custom_call.1} parent=1 // pred_region
      %1814 = dma.done [#allocation4], 32
    $region45: #{tpu_custom_call.1} parent=1 // pred_fallthru
      _
    %1815 = vsyncpa [#allocation4], 1

</llo_original>
